<compile_context>
chip_gen: v5e
topology: v5e:2x2
jax: 0.10.0
libtpu: 0.0.40
codegen_flags: <defaults>
</compile_context>

<pallas_src>
import functools
import numpy as np

import jax
import jax.numpy as jnp
from jax import lax
from jax.experimental import pallas as pl
from jax.experimental.pallas import tpu as pltpu


# ---------------------------------------------------------------------------
# Single fused kernel: QKV proj -> depthwise-conv pool + per-head LN (k,v)
#                      -> attention softmax -> output projection (+bias)
# One grid step per batch element; every intermediate lives in VMEM/vregs.
# ---------------------------------------------------------------------------

def _fused_msa_kernel(x_ref, wqkv_ref, wpool_ref, gavg_ref, gam_ref, bet_ref,
                      wproj_ref, bproj_ref, o_ref, pad_ref, *,
                      num_heads, head_dim, thw, thw_out, kernel_kv, stride_kv,
                      pads, eps):
    C = num_heads * head_dim
    T, H, W = thw
    To, Ho, Wo = thw_out
    kt, kh, kw = kernel_kv
    st, sh, sw = stride_kv
    pt, ph, pw = pads
    # stride-1 conv footprint needed to cover the strided output grid
    Tf = (To - 1) * st + 1
    Hf = (Ho - 1) * sh + 1
    Wf = (Wo - 1) * sw + 1

    # ---- 1. fused QKV projection (qkv_bias=False; scale folded into wq) -----
    x = x_ref[0]                                               # (N, C) lane-dense
    qkv = jnp.dot(x, wqkv_ref[...], preferred_element_type=jnp.float32)
    q = qkv[:, :C]                                             # (N, C)
    kv = qkv[:, C:]                                            # (N, 2C) = [k | v]

    # ---- 2. depthwise Conv3d pooling of the k/v body, entirely in VMEM ------
    pad_ref[...] = jnp.zeros_like(pad_ref)                     # zero the halo
    for t in range(T):                                         # 8 static slab copies
        for h in range(H):
            n0 = 1 + (t * H + h) * W                           # skip cls row 0
            pad_ref[t + pt, h + ph, pw:pw + W, :] = kv[n0:n0 + W, :]

    wpool = wpool_ref[...]                                     # (KK, 2C)
    # 27-tap accumulate split into kt independent chains (ILP on the 4 VALUs)
    partial = []
    for dt in range(kt):
        acc = None
        for dh in range(kh):
            for dw in range(kw):
                tap = pad_ref[dt:dt + Tf, dh:dh + Hf, dw:dw + Wf, :]
                w_tap = wpool[(dt * kh + dh) * kw + dw, :]
                term = tap * w_tap
                acc = term if acc is None else acc + term
        partial.append(acc)
    conv = partial[0]
    for acc in partial[1:]:
        conv = conv + acc                                      # (Tf, Hf, Wf, 2C)

    # cls row of kv (un-pooled) + strided subsample of the stride-1 conv grid
    rows = [kv[0:1, :]]
    for to in range(To):
        for ho in range(Ho):
            for wo in range(Wo):
                rows.append(conv[to * st, ho * sh, wo * sw:wo * sw + 1, :])
    pooled = jnp.concatenate(rows, axis=0)                     # (Nk, 2C)

    # ---- 3. per-head LayerNorm via block-diagonal group-mean matmul ---------
    gavg = gavg_ref[...]                                       # (2C, 2C)
    mu = jnp.dot(pooled, gavg, preferred_element_type=jnp.float32)
    cen = pooled - mu
    var = jnp.dot(cen * cen, gavg, preferred_element_type=jnp.float32)
    normed = cen * lax.rsqrt(var + eps) * gam_ref[...] + bet_ref[...]
    k_all = normed[:, :C]                                      # (Nk, C)
    v_all = normed[:, C:]                                      # (Nk, C)

    # ---- 4. attention (per-head static lane slices) + fused output proj -----
    ctxs = []
    for h in range(num_heads):                                 # static unroll (H=4)
        lo = h * head_dim
        hi = lo + head_dim
        q_h = q[:, lo:hi]                                      # (Nq, hd)
        k_h = k_all[:, lo:hi]                                  # (Nk, hd)
        v_h = v_all[:, lo:hi]                                  # (Nk, hd)
        s = lax.dot_general(q_h, k_h, (((1,), (1,)), ((), ())),
                            preferred_element_type=jnp.float32)    # (Nq, Nk)
        s = s - jnp.max(s, axis=-1, keepdims=True)
        e = jnp.exp(s)
        p = e / jnp.sum(e, axis=-1, keepdims=True)             # exact divide
        ctxs.append(jnp.dot(p, v_h, preferred_element_type=jnp.float32))
    ctx = jnp.concatenate(ctxs, axis=-1)                       # (Nq, C) lane-dense
    o_ref[0] = (jnp.dot(ctx, wproj_ref[...], preferred_element_type=jnp.float32)
                + bproj_ref[...])
    # TODO(synk): drop_rate=0.0 so nn.Dropout is identity; not implemented.


# ---------------------------------------------------------------------------
# Host-side (call once): fold static weights into kernel layouts
# ---------------------------------------------------------------------------

def prepare_params(params, *, num_heads, kernel_kv):
    wq, wk, wv = params["wq"], params["wk"], params["wv"]
    C = wq.shape[0]
    hd = C // num_heads
    scale = hd ** (-0.5)
    KK = int(np.prod(kernel_kv))
    Cc = 2 * C

    # softmax scale folded into the q weight; qkv_bias=False so no bias adds
    w_qkv_t = jnp.concatenate([wq.T * scale, wk.T, wv.T], axis=1)       # (C, 3C)

    def tile_dw(w5):                      # (hd,1,kt,kh,kw) -> (KK, C), c = head*hd+d
        return jnp.tile(w5.reshape(hd, KK).T, (1, num_heads))

    w_pool = jnp.concatenate([tile_dw(params["w_pool_k"]),
                              tile_dw(params["w_pool_v"])], axis=1)     # (KK, 2C)
    gamma = jnp.concatenate([jnp.tile(params["ln_k_g"], num_heads),
                             jnp.tile(params["ln_v_g"], num_heads)]).reshape(1, Cc)
    beta = jnp.concatenate([jnp.tile(params["ln_k_b"], num_heads),
                            jnp.tile(params["ln_v_b"], num_heads)]).reshape(1, Cc)
    grp = jnp.arange(Cc) // hd
    gavg = (grp[:, None] == grp[None, :]).astype(jnp.float32) / hd      # (2C, 2C)
    return dict(w_qkv_t=w_qkv_t, w_pool=w_pool, gamma=gamma, beta=beta,
                gavg=gavg, wproj_t=params["wproj"].T,
                bproj=params["bproj"].reshape(1, C))


# ---------------------------------------------------------------------------
# Forward wrapper: one pallas_call, grid over batch ("parallel")
# ---------------------------------------------------------------------------

def multi_scale_attention_forward(x, thw_shape, prepared, *, num_heads,
                                  kernel_kv=(3, 3, 3), stride_kv=(1, 2, 2),
                                  eps=1e-5):
    B, N, C = x.shape
    hd = C // num_heads
    T, H, W = thw_shape
    kt, kh, kw = kernel_kv
    st, sh, sw = stride_kv
    pads = tuple(k // 2 for k in kernel_kv)
    pt, ph, pw = pads
    To = (T + 2 * pt - kt) // st + 1
    Ho = (H + 2 * ph - kh) // sh + 1
    Wo = (W + 2 * pw - kw) // sw + 1
    Tp, Hp, Wp = T + 2 * pt, H + 2 * ph, W + 2 * pw
    Cc = 2 * C
    KK = kt * kh * kw

    kern = functools.partial(
        _fused_msa_kernel, num_heads=num_heads, head_dim=hd,
        thw=(T, H, W), thw_out=(To, Ho, Wo), kernel_kv=kernel_kv,
        stride_kv=stride_kv, pads=pads, eps=eps)

    out = pl.pallas_call(
        kern,
        grid=(B,),
        out_shape=jax.ShapeDtypeStruct((B, N, C), jnp.float32),
        in_specs=[
            pl.BlockSpec((1, N, C), lambda b: (b, 0, 0)),      # x
            pl.BlockSpec((C, 3 * C), lambda b: (0, 0)),        # fused QKV weight
            pl.BlockSpec((KK, Cc), lambda b: (0, 0)),          # tiled dw-conv weights
            pl.BlockSpec((Cc, Cc), lambda b: (0, 0)),          # group-mean matrix
            pl.BlockSpec((1, Cc), lambda b: (0, 0)),           # LN gamma (tiled)
            pl.BlockSpec((1, Cc), lambda b: (0, 0)),           # LN beta  (tiled)
            pl.BlockSpec((C, C), lambda b: (0, 0)),            # proj weight^T
            pl.BlockSpec((1, C), lambda b: (0, 0)),            # proj bias
        ],
        out_specs=pl.BlockSpec((1, N, C), lambda b: (b, 0, 0)),
        scratch_shapes=[pltpu.VMEM((Tp, Hp, Wp, Cc), jnp.float32)],
        compiler_params=pltpu.CompilerParams(dimension_semantics=("parallel",)),
    )(x, prepared["w_qkv_t"], prepared["w_pool"], prepared["gavg"],
      prepared["gamma"], prepared["beta"], prepared["wproj_t"],
      prepared["bproj"])
    # pool_q is None (kernel_q == stride_q == 1) -> q_shape is the input thw
    return out, tuple(thw_shape)


# ---------------------------------------------------------------------------
# Pure-JAX reference (mirrors the PyTorch forward exactly)
# ---------------------------------------------------------------------------

def reference_forward(x, thw_shape, params, *, num_heads,
                      kernel_kv=(3, 3, 3), stride_kv=(1, 2, 2)):
    B, N, C = x.shape
    hd = C // num_heads
    scale = hd ** (-0.5)
    pad_kv = tuple(kk // 2 for kk in kernel_kv)

    def split(t):
        return t.reshape(B, N, num_heads, hd).transpose(0, 2, 1, 3)

    q = split(x @ params["wq"].T)
    k = split(x @ params["wk"].T)
    v = split(x @ params["wv"].T)

    def pool(t, w5, g, b):
        cls_tok, body = t[:, :, :1, :], t[:, :, 1:, :]
        T, H, W = thw_shape
        body = (body.reshape(B * num_heads, T, H, W, hd)
                    .transpose(0, 4, 1, 2, 3))        # NCDHW
        out = lax.conv_general_dilated(
            body, w5, window_strides=stride_kv,
            padding=[(p, p) for p in pad_kv],
            dimension_numbers=("NCDHW", "OIDHW", "NCDHW"),
            feature_group_count=hd)
        To, Ho, Wo = out.shape[2], out.shape[3], out.shape[4]
        out = out.reshape(B, num_heads, hd, To * Ho * Wo).transpose(0, 1, 3, 2)
        out = jnp.concatenate([cls_tok, out], axis=2)
        mu = out.mean(-1, keepdims=True)
        var = ((out - mu) ** 2).mean(-1, keepdims=True)
        out = (out - mu) / jnp.sqrt(var + 1e-5) * g + b
        return out

    k = pool(k, params["w_pool_k"], params["ln_k_g"], params["ln_k_b"])
    v = pool(v, params["w_pool_v"], params["ln_v_g"], params["ln_v_b"])

    attn = (q @ jnp.swapaxes(k, -2, -1)) * scale
    attn = jax.nn.softmax(attn, axis=-1)
    Nq = q.shape[2]
    out = (attn @ v).transpose(0, 2, 1, 3).reshape(B, Nq, C)
    out = out @ params["wproj"].T + params["bproj"]
    return out, tuple(thw_shape)


# ---------------------------------------------------------------------------
# Main
# ---------------------------------------------------------------------------

if __name__ == "__main__":
    B, num_heads, dim = 2, 4, 32
    head_dim = dim // num_heads
    T, H, W = 2, 4, 4
    N = T * H * W + 1                                  # +1 cls token
    kernel_kv, stride_kv = (3, 3, 3), (1, 2, 2)

    key = jax.random.PRNGKey(0)
    ks = jax.random.split(key, 10)
    params = {
        "wq": 0.05 * jax.random.normal(ks[0], (dim, dim), jnp.float32),
        "wk": 0.05 * jax.random.normal(ks[1], (dim, dim), jnp.float32),
        "wv": 0.05 * jax.random.normal(ks[2], (dim, dim), jnp.float32),
        "wproj": 0.05 * jax.random.normal(ks[3], (dim, dim), jnp.float32),
        "bproj": 0.05 * jax.random.normal(ks[4], (dim,), jnp.float32),
        # depthwise Conv3d weights: (head_dim, 1, kt, kh, kw)
        "w_pool_k": 0.1 * jax.random.normal(ks[5], (head_dim, 1) + kernel_kv, jnp.float32),
        "w_pool_v": 0.1 * jax.random.normal(ks[6], (head_dim, 1) + kernel_kv, jnp.float32),
        "ln_k_g": 1.0 + 0.1 * jax.random.normal(ks[7], (head_dim,), jnp.float32),
        "ln_k_b": 0.05 * jax.random.normal(ks[8], (head_dim,), jnp.float32),
        "ln_v_g": jnp.ones((head_dim,), jnp.float32),
        "ln_v_b": jnp.zeros((head_dim,), jnp.float32),
    }

    x = jax.random.normal(jax.random.PRNGKey(42), (B, N, dim), jnp.float32)

    # Static weight prep done ONCE (would be hoisted out of the step function).
    prepared = prepare_params(params, num_heads=num_heads, kernel_kv=kernel_kv)

    out, q_shape = multi_scale_attention_forward(
        x, (T, H, W), prepared, num_heads=num_heads,
        kernel_kv=kernel_kv, stride_kv=stride_kv)
    out = jax.block_until_ready(out)

    ref, ref_shape = reference_forward(
        x, (T, H, W), params, num_heads=num_heads,
        kernel_kv=kernel_kv, stride_kv=stride_kv)
    ref = jax.block_until_ready(ref)

    assert out.shape == (B, N, dim), out.shape
    assert q_shape == ref_shape == (T, H, W)
    # Tolerance covers XLA default matmul/conv precision in the f32 reference
    # vs. in-kernel f32 MXU accumulation (softmax divide is exact now).
    np.testing.assert_allclose(np.asarray(out), np.asarray(ref),
                               rtol=2e-3, atol=2e-3)
    print("KERNEL_OK")
</pallas_src>

<mosaic_0001>
module attributes {stable_mosaic.version = 11 : i64} {
  func.func @_fused_msa_kernel(%arg0: i32, %arg1: memref<1x33x32xf32, #tpu.memory_space<vmem>>, %arg2: memref<32x96xf32, #tpu.memory_space<vmem>>, %arg3: memref<27x64xf32, #tpu.memory_space<vmem>>, %arg4: memref<64x64xf32, #tpu.memory_space<vmem>>, %arg5: memref<1x64xf32, #tpu.memory_space<vmem>>, %arg6: memref<1x64xf32, #tpu.memory_space<vmem>>, %arg7: memref<32x32xf32, #tpu.memory_space<vmem>>, %arg8: memref<1x32xf32, #tpu.memory_space<vmem>>, %arg9: memref<1x33x32xf32, #tpu.memory_space<vmem>>, %arg10: memref<4x6x6x64xf32, #tpu.memory_space<vmem>>) attributes {dimension_semantics = [#tpu.dimension_semantics<parallel>], iteration_bounds = array<i64: 2>, scalar_prefetch = 0 : i64, scratch_operands = 1 : i64, tpu.core_type = #tpu.core_type<tc>, window_params = [{transform_indices = @transform_0, window_bounds = array<i64: 1, 33, 32>}, {pipeline_mode = #tpu.pipeline_mode<synchronous>, transform_indices = @transform_1, window_bounds = array<i64: 32, 96>}, {pipeline_mode = #tpu.pipeline_mode<synchronous>, transform_indices = @transform_2, window_bounds = array<i64: 27, 64>}, {pipeline_mode = #tpu.pipeline_mode<synchronous>, transform_indices = @transform_3, window_bounds = array<i64: 64, 64>}, {pipeline_mode = #tpu.pipeline_mode<synchronous>, transform_indices = @transform_4, window_bounds = array<i64: 1, 64>}, {pipeline_mode = #tpu.pipeline_mode<synchronous>, transform_indices = @transform_5, window_bounds = array<i64: 1, 64>}, {pipeline_mode = #tpu.pipeline_mode<synchronous>, transform_indices = @transform_6, window_bounds = array<i64: 32, 32>}, {pipeline_mode = #tpu.pipeline_mode<synchronous>, transform_indices = @transform_7, window_bounds = array<i64: 1, 32>}, {transform_indices = @transform_8, window_bounds = array<i64: 1, 33, 32>}]} {
    %c0 = arith.constant 0 : index
    %c0_0 = arith.constant 0 : index
    %c0_1 = arith.constant 0 : index
    %0 = vector.load %arg1[%c0, %c0_0, %c0_1] : memref<1x33x32xf32, #tpu.memory_space<vmem>>, vector<1x33x32xf32>
    %1 = vector.shape_cast %0 : vector<1x33x32xf32> to vector<33x32xf32>
    %c0_2 = arith.constant 0 : index
    %c0_3 = arith.constant 0 : index
    %2 = vector.load %arg2[%c0_2, %c0_3] : memref<32x96xf32, #tpu.memory_space<vmem>>, vector<32x96xf32>
    %cst = arith.constant dense<0.000000e+00> : vector<33x96xf32>
    %3 = tpu.matmul %1, %2, %cst {dimension_numbers = #tpu.dot_dimension_numbers<[1], [0], [0], [1], [0, 0, 1, 1], [], []>} : vector<33x32xf32>, vector<32x96xf32>, vector<33x96xf32> -> vector<33x96xf32>
    %4 = vector.extract_strided_slice %3 {offsets = [0, 0], sizes = [33, 32], strides = [1, 1]} : vector<33x96xf32> to vector<33x32xf32>
    %5 = vector.extract_strided_slice %3 {offsets = [0, 32], sizes = [33, 64], strides = [1, 1]} : vector<33x96xf32> to vector<33x64xf32>
    %cst_4 = arith.constant 0.000000e+00 : f32
    %6 = vector.broadcast %cst_4 : f32 to vector<4x6x6x64xf32>
    %c0_5 = arith.constant 0 : index
    %c0_6 = arith.constant 0 : index
    %c0_7 = arith.constant 0 : index
    %c0_8 = arith.constant 0 : index
    %7 = vector.load %arg10[%c0_5, %c0_6, %c0_7, %c0_8] : memref<4x6x6x64xf32, #tpu.memory_space<vmem>>, vector<4x6x6x64xf32>
    tpu.vector_store %arg10[%c0_5, %c0_6, %c0_7, %c0_8], %6 {strides = array<i32>} : memref<4x6x6x64xf32, #tpu.memory_space<vmem>>, vector<4x6x6x64xf32>,
    %8 = vector.extract_strided_slice %5 {offsets = [1, 0], sizes = [4, 64], strides = [1, 1]} : vector<33x64xf32> to vector<4x64xf32>
    %c1 = arith.constant 1 : index
    %c1_9 = arith.constant 1 : index
    %c1_10 = arith.constant 1 : index
    %c0_11 = arith.constant 0 : index
    %9 = vector.load %arg10[%c1, %c1_9, %c1_10, %c0_11] : memref<4x6x6x64xf32, #tpu.memory_space<vmem>>, vector<1x1x4x64xf32>
    %10 = vector.shape_cast %9 : vector<1x1x4x64xf32> to vector<4x64xf32>
    %11 = vector.shape_cast %8 : vector<4x64xf32> to vector<1x1x4x64xf32>
    tpu.vector_store %arg10[%c1, %c1_9, %c1_10, %c0_11], %11 {strides = array<i32>} : memref<4x6x6x64xf32, #tpu.memory_space<vmem>>, vector<1x1x4x64xf32>,
    %12 = vector.extract_strided_slice %5 {offsets = [5, 0], sizes = [4, 64], strides = [1, 1]} : vector<33x64xf32> to vector<4x64xf32>
    %c1_12 = arith.constant 1 : index
    %c2 = arith.constant 2 : index
    %c1_13 = arith.constant 1 : index
    %c0_14 = arith.constant 0 : index
    %13 = vector.load %arg10[%c1_12, %c2, %c1_13, %c0_14] : memref<4x6x6x64xf32, #tpu.memory_space<vmem>>, vector<1x1x4x64xf32>
    %14 = vector.shape_cast %13 : vector<1x1x4x64xf32> to vector<4x64xf32>
    %15 = vector.shape_cast %12 : vector<4x64xf32> to vector<1x1x4x64xf32>
    tpu.vector_store %arg10[%c1_12, %c2, %c1_13, %c0_14], %15 {strides = array<i32>} : memref<4x6x6x64xf32, #tpu.memory_space<vmem>>, vector<1x1x4x64xf32>,
    %16 = vector.extract_strided_slice %5 {offsets = [9, 0], sizes = [4, 64], strides = [1, 1]} : vector<33x64xf32> to vector<4x64xf32>
    %c1_15 = arith.constant 1 : index
    %c3 = arith.constant 3 : index
    %c1_16 = arith.constant 1 : index
    %c0_17 = arith.constant 0 : index
    %17 = vector.load %arg10[%c1_15, %c3, %c1_16, %c0_17] : memref<4x6x6x64xf32, #tpu.memory_space<vmem>>, vector<1x1x4x64xf32>
    %18 = vector.shape_cast %17 : vector<1x1x4x64xf32> to vector<4x64xf32>
    %19 = vector.shape_cast %16 : vector<4x64xf32> to vector<1x1x4x64xf32>
    tpu.vector_store %arg10[%c1_15, %c3, %c1_16, %c0_17], %19 {strides = array<i32>} : memref<4x6x6x64xf32, #tpu.memory_space<vmem>>, vector<1x1x4x64xf32>,
    %20 = vector.extract_strided_slice %5 {offsets = [13, 0], sizes = [4, 64], strides = [1, 1]} : vector<33x64xf32> to vector<4x64xf32>
    %c1_18 = arith.constant 1 : index
    %c4 = arith.constant 4 : index
    %c1_19 = arith.constant 1 : index
    %c0_20 = arith.constant 0 : index
    %21 = vector.load %arg10[%c1_18, %c4, %c1_19, %c0_20] : memref<4x6x6x64xf32, #tpu.memory_space<vmem>>, vector<1x1x4x64xf32>
    %22 = vector.shape_cast %21 : vector<1x1x4x64xf32> to vector<4x64xf32>
    %23 = vector.shape_cast %20 : vector<4x64xf32> to vector<1x1x4x64xf32>
    tpu.vector_store %arg10[%c1_18, %c4, %c1_19, %c0_20], %23 {strides = array<i32>} : memref<4x6x6x64xf32, #tpu.memory_space<vmem>>, vector<1x1x4x64xf32>,
    %24 = vector.extract_strided_slice %5 {offsets = [17, 0], sizes = [4, 64], strides = [1, 1]} : vector<33x64xf32> to vector<4x64xf32>
    %c2_21 = arith.constant 2 : index
    %c1_22 = arith.constant 1 : index
    %c1_23 = arith.constant 1 : index
    %c0_24 = arith.constant 0 : index
    %25 = vector.load %arg10[%c2_21, %c1_22, %c1_23, %c0_24] : memref<4x6x6x64xf32, #tpu.memory_space<vmem>>, vector<1x1x4x64xf32>
    %26 = vector.shape_cast %25 : vector<1x1x4x64xf32> to vector<4x64xf32>
    %27 = vector.shape_cast %24 : vector<4x64xf32> to vector<1x1x4x64xf32>
    tpu.vector_store %arg10[%c2_21, %c1_22, %c1_23, %c0_24], %27 {strides = array<i32>} : memref<4x6x6x64xf32, #tpu.memory_space<vmem>>, vector<1x1x4x64xf32>,
    %28 = vector.extract_strided_slice %5 {offsets = [21, 0], sizes = [4, 64], strides = [1, 1]} : vector<33x64xf32> to vector<4x64xf32>
    %c2_25 = arith.constant 2 : index
    %c2_26 = arith.constant 2 : index
    %c1_27 = arith.constant 1 : index
    %c0_28 = arith.constant 0 : index
    %29 = vector.load %arg10[%c2_25, %c2_26, %c1_27, %c0_28] : memref<4x6x6x64xf32, #tpu.memory_space<vmem>>, vector<1x1x4x64xf32>
    %30 = vector.shape_cast %29 : vector<1x1x4x64xf32> to vector<4x64xf32>
    %31 = vector.shape_cast %28 : vector<4x64xf32> to vector<1x1x4x64xf32>
    tpu.vector_store %arg10[%c2_25, %c2_26, %c1_27, %c0_28], %31 {strides = array<i32>} : memref<4x6x6x64xf32, #tpu.memory_space<vmem>>, vector<1x1x4x64xf32>,
    %32 = vector.extract_strided_slice %5 {offsets = [25, 0], sizes = [4, 64], strides = [1, 1]} : vector<33x64xf32> to vector<4x64xf32>
    %c2_29 = arith.constant 2 : index
    %c3_30 = arith.constant 3 : index
    %c1_31 = arith.constant 1 : index
    %c0_32 = arith.constant 0 : index
    %33 = vector.load %arg10[%c2_29, %c3_30, %c1_31, %c0_32] : memref<4x6x6x64xf32, #tpu.memory_space<vmem>>, vector<1x1x4x64xf32>
    %34 = vector.shape_cast %33 : vector<1x1x4x64xf32> to vector<4x64xf32>
    %35 = vector.shape_cast %32 : vector<4x64xf32> to vector<1x1x4x64xf32>
    tpu.vector_store %arg10[%c2_29, %c3_30, %c1_31, %c0_32], %35 {strides = array<i32>} : memref<4x6x6x64xf32, #tpu.memory_space<vmem>>, vector<1x1x4x64xf32>,
    %36 = vector.extract_strided_slice %5 {offsets = [29, 0], sizes = [4, 64], strides = [1, 1]} : vector<33x64xf32> to vector<4x64xf32>
    %c2_33 = arith.constant 2 : index
    %c4_34 = arith.constant 4 : index
    %c1_35 = arith.constant 1 : index
    %c0_36 = arith.constant 0 : index
    %37 = vector.load %arg10[%c2_33, %c4_34, %c1_35, %c0_36] : memref<4x6x6x64xf32, #tpu.memory_space<vmem>>, vector<1x1x4x64xf32>
    %38 = vector.shape_cast %37 : vector<1x1x4x64xf32> to vector<4x64xf32>
    %39 = vector.shape_cast %36 : vector<4x64xf32> to vector<1x1x4x64xf32>
    tpu.vector_store %arg10[%c2_33, %c4_34, %c1_35, %c0_36], %39 {strides = array<i32>} : memref<4x6x6x64xf32, #tpu.memory_space<vmem>>, vector<1x1x4x64xf32>,
    %c0_37 = arith.constant 0 : index
    %c0_38 = arith.constant 0 : index
    %40 = vector.load %arg3[%c0_37, %c0_38] : memref<27x64xf32, #tpu.memory_space<vmem>>, vector<27x64xf32>
    %c0_39 = arith.constant 0 : index
    %c0_40 = arith.constant 0 : index
    %c0_41 = arith.constant 0 : index
    %c0_42 = arith.constant 0 : index
    %41 = vector.load %arg10[%c0_39, %c0_40, %c0_41, %c0_42] : memref<4x6x6x64xf32, #tpu.memory_space<vmem>>, vector<2x3x3x64xf32>
    %42 = vector.extract_strided_slice %40 {offsets = [0, 0], sizes = [1, 64], strides = [1, 1]} : vector<27x64xf32> to vector<1x64xf32>
    %43 = vector.shape_cast %42 : vector<1x64xf32> to vector<64xf32>
    %44 = vector.shape_cast %43 : vector<64xf32> to vector<1x1x1x64xf32>
    %45 = vector.broadcast %44 : vector<1x1x1x64xf32> to vector<2x3x3x64xf32>
    %46 = arith.mulf %41, %45 : vector<2x3x3x64xf32>
    %c0_43 = arith.constant 0 : index
    %c0_44 = arith.constant 0 : index
    %c1_45 = arith.constant 1 : index
    %c0_46 = arith.constant 0 : index
    %47 = vector.load %arg10[%c0_43, %c0_44, %c1_45, %c0_46] : memref<4x6x6x64xf32, #tpu.memory_space<vmem>>, vector<2x3x3x64xf32>
    %48 = vector.extract_strided_slice %40 {offsets = [1, 0], sizes = [1, 64], strides = [1, 1]} : vector<27x64xf32> to vector<1x64xf32>
    %49 = vector.shape_cast %48 : vector<1x64xf32> to vector<64xf32>
    %50 = vector.shape_cast %49 : vector<64xf32> to vector<1x1x1x64xf32>
    %51 = vector.broadcast %50 : vector<1x1x1x64xf32> to vector<2x3x3x64xf32>
    %52 = arith.mulf %47, %51 : vector<2x3x3x64xf32>
    %53 = arith.addf %46, %52 : vector<2x3x3x64xf32>
    %c0_47 = arith.constant 0 : index
    %c0_48 = arith.constant 0 : index
    %c2_49 = arith.constant 2 : index
    %c0_50 = arith.constant 0 : index
    %54 = vector.load %arg10[%c0_47, %c0_48, %c2_49, %c0_50] : memref<4x6x6x64xf32, #tpu.memory_space<vmem>>, vector<2x3x3x64xf32>
    %55 = vector.extract_strided_slice %40 {offsets = [2, 0], sizes = [1, 64], strides = [1, 1]} : vector<27x64xf32> to vector<1x64xf32>
    %56 = vector.shape_cast %55 : vector<1x64xf32> to vector<64xf32>
    %57 = vector.shape_cast %56 : vector<64xf32> to vector<1x1x1x64xf32>
    %58 = vector.broadcast %57 : vector<1x1x1x64xf32> to vector<2x3x3x64xf32>
    %59 = arith.mulf %54, %58 : vector<2x3x3x64xf32>
    %60 = arith.addf %53, %59 : vector<2x3x3x64xf32>
    %c0_51 = arith.constant 0 : index
    %c1_52 = arith.constant 1 : index
    %c0_53 = arith.constant 0 : index
    %c0_54 = arith.constant 0 : index
    %61 = vector.load %arg10[%c0_51, %c1_52, %c0_53, %c0_54] : memref<4x6x6x64xf32, #tpu.memory_space<vmem>>, vector<2x3x3x64xf32>
    %62 = vector.extract_strided_slice %40 {offsets = [3, 0], sizes = [1, 64], strides = [1, 1]} : vector<27x64xf32> to vector<1x64xf32>
    %63 = vector.shape_cast %62 : vector<1x64xf32> to vector<64xf32>
    %64 = vector.shape_cast %63 : vector<64xf32> to vector<1x1x1x64xf32>
    %65 = vector.broadcast %64 : vector<1x1x1x64xf32> to vector<2x3x3x64xf32>
    %66 = arith.mulf %61, %65 : vector<2x3x3x64xf32>
    %67 = arith.addf %60, %66 : vector<2x3x3x64xf32>
    %c0_55 = arith.constant 0 : index
    %c1_56 = arith.constant 1 : index
    %c1_57 = arith.constant 1 : index
    %c0_58 = arith.constant 0 : index
    %68 = vector.load %arg10[%c0_55, %c1_56, %c1_57, %c0_58] : memref<4x6x6x64xf32, #tpu.memory_space<vmem>>, vector<2x3x3x64xf32>
    %69 = vector.extract_strided_slice %40 {offsets = [4, 0], sizes = [1, 64], strides = [1, 1]} : vector<27x64xf32> to vector<1x64xf32>
    %70 = vector.shape_cast %69 : vector<1x64xf32> to vector<64xf32>
    %71 = vector.shape_cast %70 : vector<64xf32> to vector<1x1x1x64xf32>
    %72 = vector.broadcast %71 : vector<1x1x1x64xf32> to vector<2x3x3x64xf32>
    %73 = arith.mulf %68, %72 : vector<2x3x3x64xf32>
    %74 = arith.addf %67, %73 : vector<2x3x3x64xf32>
    %c0_59 = arith.constant 0 : index
    %c1_60 = arith.constant 1 : index
    %c2_61 = arith.constant 2 : index
    %c0_62 = arith.constant 0 : index
    %75 = vector.load %arg10[%c0_59, %c1_60, %c2_61, %c0_62] : memref<4x6x6x64xf32, #tpu.memory_space<vmem>>, vector<2x3x3x64xf32>
    %76 = vector.extract_strided_slice %40 {offsets = [5, 0], sizes = [1, 64], strides = [1, 1]} : vector<27x64xf32> to vector<1x64xf32>
    %77 = vector.shape_cast %76 : vector<1x64xf32> to vector<64xf32>
    %78 = vector.shape_cast %77 : vector<64xf32> to vector<1x1x1x64xf32>
    %79 = vector.broadcast %78 : vector<1x1x1x64xf32> to vector<2x3x3x64xf32>
    %80 = arith.mulf %75, %79 : vector<2x3x3x64xf32>
    %81 = arith.addf %74, %80 : vector<2x3x3x64xf32>
    %c0_63 = arith.constant 0 : index
    %c2_64 = arith.constant 2 : index
    %c0_65 = arith.constant 0 : index
    %c0_66 = arith.constant 0 : index
    %82 = vector.load %arg10[%c0_63, %c2_64, %c0_65, %c0_66] : memref<4x6x6x64xf32, #tpu.memory_space<vmem>>, vector<2x3x3x64xf32>
    %83 = vector.extract_strided_slice %40 {offsets = [6, 0], sizes = [1, 64], strides = [1, 1]} : vector<27x64xf32> to vector<1x64xf32>
    %84 = vector.shape_cast %83 : vector<1x64xf32> to vector<64xf32>
    %85 = vector.shape_cast %84 : vector<64xf32> to vector<1x1x1x64xf32>
    %86 = vector.broadcast %85 : vector<1x1x1x64xf32> to vector<2x3x3x64xf32>
    %87 = arith.mulf %82, %86 : vector<2x3x3x64xf32>
    %88 = arith.addf %81, %87 : vector<2x3x3x64xf32>
    %c0_67 = arith.constant 0 : index
    %c2_68 = arith.constant 2 : index
    %c1_69 = arith.constant 1 : index
    %c0_70 = arith.constant 0 : index
    %89 = vector.load %arg10[%c0_67, %c2_68, %c1_69, %c0_70] : memref<4x6x6x64xf32, #tpu.memory_space<vmem>>, vector<2x3x3x64xf32>
    %90 = vector.extract_strided_slice %40 {offsets = [7, 0], sizes = [1, 64], strides = [1, 1]} : vector<27x64xf32> to vector<1x64xf32>
    %91 = vector.shape_cast %90 : vector<1x64xf32> to vector<64xf32>
    %92 = vector.shape_cast %91 : vector<64xf32> to vector<1x1x1x64xf32>
    %93 = vector.broadcast %92 : vector<1x1x1x64xf32> to vector<2x3x3x64xf32>
    %94 = arith.mulf %89, %93 : vector<2x3x3x64xf32>
    %95 = arith.addf %88, %94 : vector<2x3x3x64xf32>
    %c0_71 = arith.constant 0 : index
    %c2_72 = arith.constant 2 : index
    %c2_73 = arith.constant 2 : index
    %c0_74 = arith.constant 0 : index
    %96 = vector.load %arg10[%c0_71, %c2_72, %c2_73, %c0_74] : memref<4x6x6x64xf32, #tpu.memory_space<vmem>>, vector<2x3x3x64xf32>
    %97 = vector.extract_strided_slice %40 {offsets = [8, 0], sizes = [1, 64], strides = [1, 1]} : vector<27x64xf32> to vector<1x64xf32>
    %98 = vector.shape_cast %97 : vector<1x64xf32> to vector<64xf32>
    %99 = vector.shape_cast %98 : vector<64xf32> to vector<1x1x1x64xf32>
    %100 = vector.broadcast %99 : vector<1x1x1x64xf32> to vector<2x3x3x64xf32>
    %101 = arith.mulf %96, %100 : vector<2x3x3x64xf32>
    %102 = arith.addf %95, %101 : vector<2x3x3x64xf32>
    %c1_75 = arith.constant 1 : index
    %c0_76 = arith.constant 0 : index
    %c0_77 = arith.constant 0 : index
    %c0_78 = arith.constant 0 : index
    %103 = vector.load %arg10[%c1_75, %c0_76, %c0_77, %c0_78] : memref<4x6x6x64xf32, #tpu.memory_space<vmem>>, vector<2x3x3x64xf32>
    %104 = vector.extract_strided_slice %40 {offsets = [9, 0], sizes = [1, 64], strides = [1, 1]} : vector<27x64xf32> to vector<1x64xf32>
    %105 = vector.shape_cast %104 : vector<1x64xf32> to vector<64xf32>
    %106 = vector.shape_cast %105 : vector<64xf32> to vector<1x1x1x64xf32>
    %107 = vector.broadcast %106 : vector<1x1x1x64xf32> to vector<2x3x3x64xf32>
    %108 = arith.mulf %103, %107 : vector<2x3x3x64xf32>
    %c1_79 = arith.constant 1 : index
    %c0_80 = arith.constant 0 : index
    %c1_81 = arith.constant 1 : index
    %c0_82 = arith.constant 0 : index
    %109 = vector.load %arg10[%c1_79, %c0_80, %c1_81, %c0_82] : memref<4x6x6x64xf32, #tpu.memory_space<vmem>>, vector<2x3x3x64xf32>
    %110 = vector.extract_strided_slice %40 {offsets = [10, 0], sizes = [1, 64], strides = [1, 1]} : vector<27x64xf32> to vector<1x64xf32>
    %111 = vector.shape_cast %110 : vector<1x64xf32> to vector<64xf32>
    %112 = vector.shape_cast %111 : vector<64xf32> to vector<1x1x1x64xf32>
    %113 = vector.broadcast %112 : vector<1x1x1x64xf32> to vector<2x3x3x64xf32>
    %114 = arith.mulf %109, %113 : vector<2x3x3x64xf32>
    %115 = arith.addf %108, %114 : vector<2x3x3x64xf32>
    %c1_83 = arith.constant 1 : index
    %c0_84 = arith.constant 0 : index
    %c2_85 = arith.constant 2 : index
    %c0_86 = arith.constant 0 : index
    %116 = vector.load %arg10[%c1_83, %c0_84, %c2_85, %c0_86] : memref<4x6x6x64xf32, #tpu.memory_space<vmem>>, vector<2x3x3x64xf32>
    %117 = vector.extract_strided_slice %40 {offsets = [11, 0], sizes = [1, 64], strides = [1, 1]} : vector<27x64xf32> to vector<1x64xf32>
    %118 = vector.shape_cast %117 : vector<1x64xf32> to vector<64xf32>
    %119 = vector.shape_cast %118 : vector<64xf32> to vector<1x1x1x64xf32>
    %120 = vector.broadcast %119 : vector<1x1x1x64xf32> to vector<2x3x3x64xf32>
    %121 = arith.mulf %116, %120 : vector<2x3x3x64xf32>
    %122 = arith.addf %115, %121 : vector<2x3x3x64xf32>
    %c1_87 = arith.constant 1 : index
    %c1_88 = arith.constant 1 : index
    %c0_89 = arith.constant 0 : index
    %c0_90 = arith.constant 0 : index
    %123 = vector.load %arg10[%c1_87, %c1_88, %c0_89, %c0_90] : memref<4x6x6x64xf32, #tpu.memory_space<vmem>>, vector<2x3x3x64xf32>
    %124 = vector.extract_strided_slice %40 {offsets = [12, 0], sizes = [1, 64], strides = [1, 1]} : vector<27x64xf32> to vector<1x64xf32>
    %125 = vector.shape_cast %124 : vector<1x64xf32> to vector<64xf32>
    %126 = vector.shape_cast %125 : vector<64xf32> to vector<1x1x1x64xf32>
    %127 = vector.broadcast %126 : vector<1x1x1x64xf32> to vector<2x3x3x64xf32>
    %128 = arith.mulf %123, %127 : vector<2x3x3x64xf32>
    %129 = arith.addf %122, %128 : vector<2x3x3x64xf32>
    %c1_91 = arith.constant 1 : index
    %c1_92 = arith.constant 1 : index
    %c1_93 = arith.constant 1 : index
    %c0_94 = arith.constant 0 : index
    %130 = vector.load %arg10[%c1_91, %c1_92, %c1_93, %c0_94] : memref<4x6x6x64xf32, #tpu.memory_space<vmem>>, vector<2x3x3x64xf32>
    %131 = vector.extract_strided_slice %40 {offsets = [13, 0], sizes = [1, 64], strides = [1, 1]} : vector<27x64xf32> to vector<1x64xf32>
    %132 = vector.shape_cast %131 : vector<1x64xf32> to vector<64xf32>
    %133 = vector.shape_cast %132 : vector<64xf32> to vector<1x1x1x64xf32>
    %134 = vector.broadcast %133 : vector<1x1x1x64xf32> to vector<2x3x3x64xf32>
    %135 = arith.mulf %130, %134 : vector<2x3x3x64xf32>
    %136 = arith.addf %129, %135 : vector<2x3x3x64xf32>
    %c1_95 = arith.constant 1 : index
    %c1_96 = arith.constant 1 : index
    %c2_97 = arith.constant 2 : index
    %c0_98 = arith.constant 0 : index
    %137 = vector.load %arg10[%c1_95, %c1_96, %c2_97, %c0_98] : memref<4x6x6x64xf32, #tpu.memory_space<vmem>>, vector<2x3x3x64xf32>
    %138 = vector.extract_strided_slice %40 {offsets = [14, 0], sizes = [1, 64], strides = [1, 1]} : vector<27x64xf32> to vector<1x64xf32>
    %139 = vector.shape_cast %138 : vector<1x64xf32> to vector<64xf32>
    %140 = vector.shape_cast %139 : vector<64xf32> to vector<1x1x1x64xf32>
    %141 = vector.broadcast %140 : vector<1x1x1x64xf32> to vector<2x3x3x64xf32>
    %142 = arith.mulf %137, %141 : vector<2x3x3x64xf32>
    %143 = arith.addf %136, %142 : vector<2x3x3x64xf32>
    %c1_99 = arith.constant 1 : index
    %c2_100 = arith.constant 2 : index
    %c0_101 = arith.constant 0 : index
    %c0_102 = arith.constant 0 : index
    %144 = vector.load %arg10[%c1_99, %c2_100, %c0_101, %c0_102] : memref<4x6x6x64xf32, #tpu.memory_space<vmem>>, vector<2x3x3x64xf32>
    %145 = vector.extract_strided_slice %40 {offsets = [15, 0], sizes = [1, 64], strides = [1, 1]} : vector<27x64xf32> to vector<1x64xf32>
    %146 = vector.shape_cast %145 : vector<1x64xf32> to vector<64xf32>
    %147 = vector.shape_cast %146 : vector<64xf32> to vector<1x1x1x64xf32>
    %148 = vector.broadcast %147 : vector<1x1x1x64xf32> to vector<2x3x3x64xf32>
    %149 = arith.mulf %144, %148 : vector<2x3x3x64xf32>
    %150 = arith.addf %143, %149 : vector<2x3x3x64xf32>
    %c1_103 = arith.constant 1 : index
    %c2_104 = arith.constant 2 : index
    %c1_105 = arith.constant 1 : index
    %c0_106 = arith.constant 0 : index
    %151 = vector.load %arg10[%c1_103, %c2_104, %c1_105, %c0_106] : memref<4x6x6x64xf32, #tpu.memory_space<vmem>>, vector<2x3x3x64xf32>
    %152 = vector.extract_strided_slice %40 {offsets = [16, 0], sizes = [1, 64], strides = [1, 1]} : vector<27x64xf32> to vector<1x64xf32>
    %153 = vector.shape_cast %152 : vector<1x64xf32> to vector<64xf32>
    %154 = vector.shape_cast %153 : vector<64xf32> to vector<1x1x1x64xf32>
    %155 = vector.broadcast %154 : vector<1x1x1x64xf32> to vector<2x3x3x64xf32>
    %156 = arith.mulf %151, %155 : vector<2x3x3x64xf32>
    %157 = arith.addf %150, %156 : vector<2x3x3x64xf32>
    %c1_107 = arith.constant 1 : index
    %c2_108 = arith.constant 2 : index
    %c2_109 = arith.constant 2 : index
    %c0_110 = arith.constant 0 : index
    %158 = vector.load %arg10[%c1_107, %c2_108, %c2_109, %c0_110] : memref<4x6x6x64xf32, #tpu.memory_space<vmem>>, vector<2x3x3x64xf32>
    %159 = vector.extract_strided_slice %40 {offsets = [17, 0], sizes = [1, 64], strides = [1, 1]} : vector<27x64xf32> to vector<1x64xf32>
    %160 = vector.shape_cast %159 : vector<1x64xf32> to vector<64xf32>
    %161 = vector.shape_cast %160 : vector<64xf32> to vector<1x1x1x64xf32>
    %162 = vector.broadcast %161 : vector<1x1x1x64xf32> to vector<2x3x3x64xf32>
    %163 = arith.mulf %158, %162 : vector<2x3x3x64xf32>
    %164 = arith.addf %157, %163 : vector<2x3x3x64xf32>
    %c2_111 = arith.constant 2 : index
    %c0_112 = arith.constant 0 : index
    %c0_113 = arith.constant 0 : index
    %c0_114 = arith.constant 0 : index
    %165 = vector.load %arg10[%c2_111, %c0_112, %c0_113, %c0_114] : memref<4x6x6x64xf32, #tpu.memory_space<vmem>>, vector<2x3x3x64xf32>
    %166 = vector.extract_strided_slice %40 {offsets = [18, 0], sizes = [1, 64], strides = [1, 1]} : vector<27x64xf32> to vector<1x64xf32>
    %167 = vector.shape_cast %166 : vector<1x64xf32> to vector<64xf32>
    %168 = vector.shape_cast %167 : vector<64xf32> to vector<1x1x1x64xf32>
    %169 = vector.broadcast %168 : vector<1x1x1x64xf32> to vector<2x3x3x64xf32>
    %170 = arith.mulf %165, %169 : vector<2x3x3x64xf32>
    %c2_115 = arith.constant 2 : index
    %c0_116 = arith.constant 0 : index
    %c1_117 = arith.constant 1 : index
    %c0_118 = arith.constant 0 : index
    %171 = vector.load %arg10[%c2_115, %c0_116, %c1_117, %c0_118] : memref<4x6x6x64xf32, #tpu.memory_space<vmem>>, vector<2x3x3x64xf32>
    %172 = vector.extract_strided_slice %40 {offsets = [19, 0], sizes = [1, 64], strides = [1, 1]} : vector<27x64xf32> to vector<1x64xf32>
    %173 = vector.shape_cast %172 : vector<1x64xf32> to vector<64xf32>
    %174 = vector.shape_cast %173 : vector<64xf32> to vector<1x1x1x64xf32>
    %175 = vector.broadcast %174 : vector<1x1x1x64xf32> to vector<2x3x3x64xf32>
    %176 = arith.mulf %171, %175 : vector<2x3x3x64xf32>
    %177 = arith.addf %170, %176 : vector<2x3x3x64xf32>
    %c2_119 = arith.constant 2 : index
    %c0_120 = arith.constant 0 : index
    %c2_121 = arith.constant 2 : index
    %c0_122 = arith.constant 0 : index
    %178 = vector.load %arg10[%c2_119, %c0_120, %c2_121, %c0_122] : memref<4x6x6x64xf32, #tpu.memory_space<vmem>>, vector<2x3x3x64xf32>
    %179 = vector.extract_strided_slice %40 {offsets = [20, 0], sizes = [1, 64], strides = [1, 1]} : vector<27x64xf32> to vector<1x64xf32>
    %180 = vector.shape_cast %179 : vector<1x64xf32> to vector<64xf32>
    %181 = vector.shape_cast %180 : vector<64xf32> to vector<1x1x1x64xf32>
    %182 = vector.broadcast %181 : vector<1x1x1x64xf32> to vector<2x3x3x64xf32>
    %183 = arith.mulf %178, %182 : vector<2x3x3x64xf32>
    %184 = arith.addf %177, %183 : vector<2x3x3x64xf32>
    %c2_123 = arith.constant 2 : index
    %c1_124 = arith.constant 1 : index
    %c0_125 = arith.constant 0 : index
    %c0_126 = arith.constant 0 : index
    %185 = vector.load %arg10[%c2_123, %c1_124, %c0_125, %c0_126] : memref<4x6x6x64xf32, #tpu.memory_space<vmem>>, vector<2x3x3x64xf32>
    %186 = vector.extract_strided_slice %40 {offsets = [21, 0], sizes = [1, 64], strides = [1, 1]} : vector<27x64xf32> to vector<1x64xf32>
    %187 = vector.shape_cast %186 : vector<1x64xf32> to vector<64xf32>
    %188 = vector.shape_cast %187 : vector<64xf32> to vector<1x1x1x64xf32>
    %189 = vector.broadcast %188 : vector<1x1x1x64xf32> to vector<2x3x3x64xf32>
    %190 = arith.mulf %185, %189 : vector<2x3x3x64xf32>
    %191 = arith.addf %184, %190 : vector<2x3x3x64xf32>
    %c2_127 = arith.constant 2 : index
    %c1_128 = arith.constant 1 : index
    %c1_129 = arith.constant 1 : index
    %c0_130 = arith.constant 0 : index
    %192 = vector.load %arg10[%c2_127, %c1_128, %c1_129, %c0_130] : memref<4x6x6x64xf32, #tpu.memory_space<vmem>>, vector<2x3x3x64xf32>
    %193 = vector.extract_strided_slice %40 {offsets = [22, 0], sizes = [1, 64], strides = [1, 1]} : vector<27x64xf32> to vector<1x64xf32>
    %194 = vector.shape_cast %193 : vector<1x64xf32> to vector<64xf32>
    %195 = vector.shape_cast %194 : vector<64xf32> to vector<1x1x1x64xf32>
    %196 = vector.broadcast %195 : vector<1x1x1x64xf32> to vector<2x3x3x64xf32>
    %197 = arith.mulf %192, %196 : vector<2x3x3x64xf32>
    %198 = arith.addf %191, %197 : vector<2x3x3x64xf32>
    %c2_131 = arith.constant 2 : index
    %c1_132 = arith.constant 1 : index
    %c2_133 = arith.constant 2 : index
    %c0_134 = arith.constant 0 : index
    %199 = vector.load %arg10[%c2_131, %c1_132, %c2_133, %c0_134] : memref<4x6x6x64xf32, #tpu.memory_space<vmem>>, vector<2x3x3x64xf32>
    %200 = vector.extract_strided_slice %40 {offsets = [23, 0], sizes = [1, 64], strides = [1, 1]} : vector<27x64xf32> to vector<1x64xf32>
    %201 = vector.shape_cast %200 : vector<1x64xf32> to vector<64xf32>
    %202 = vector.shape_cast %201 : vector<64xf32> to vector<1x1x1x64xf32>
    %203 = vector.broadcast %202 : vector<1x1x1x64xf32> to vector<2x3x3x64xf32>
    %204 = arith.mulf %199, %203 : vector<2x3x3x64xf32>
    %205 = arith.addf %198, %204 : vector<2x3x3x64xf32>
    %c2_135 = arith.constant 2 : index
    %c2_136 = arith.constant 2 : index
    %c0_137 = arith.constant 0 : index
    %c0_138 = arith.constant 0 : index
    %206 = vector.load %arg10[%c2_135, %c2_136, %c0_137, %c0_138] : memref<4x6x6x64xf32, #tpu.memory_space<vmem>>, vector<2x3x3x64xf32>
    %207 = vector.extract_strided_slice %40 {offsets = [24, 0], sizes = [1, 64], strides = [1, 1]} : vector<27x64xf32> to vector<1x64xf32>
    %208 = vector.shape_cast %207 : vector<1x64xf32> to vector<64xf32>
    %209 = vector.shape_cast %208 : vector<64xf32> to vector<1x1x1x64xf32>
    %210 = vector.broadcast %209 : vector<1x1x1x64xf32> to vector<2x3x3x64xf32>
    %211 = arith.mulf %206, %210 : vector<2x3x3x64xf32>
    %212 = arith.addf %205, %211 : vector<2x3x3x64xf32>
    %c2_139 = arith.constant 2 : index
    %c2_140 = arith.constant 2 : index
    %c1_141 = arith.constant 1 : index
    %c0_142 = arith.constant 0 : index
    %213 = vector.load %arg10[%c2_139, %c2_140, %c1_141, %c0_142] : memref<4x6x6x64xf32, #tpu.memory_space<vmem>>, vector<2x3x3x64xf32>
    %214 = vector.extract_strided_slice %40 {offsets = [25, 0], sizes = [1, 64], strides = [1, 1]} : vector<27x64xf32> to vector<1x64xf32>
    %215 = vector.shape_cast %214 : vector<1x64xf32> to vector<64xf32>
    %216 = vector.shape_cast %215 : vector<64xf32> to vector<1x1x1x64xf32>
    %217 = vector.broadcast %216 : vector<1x1x1x64xf32> to vector<2x3x3x64xf32>
    %218 = arith.mulf %213, %217 : vector<2x3x3x64xf32>
    %219 = arith.addf %212, %218 : vector<2x3x3x64xf32>
    %c2_143 = arith.constant 2 : index
    %c2_144 = arith.constant 2 : index
    %c2_145 = arith.constant 2 : index
    %c0_146 = arith.constant 0 : index
    %220 = vector.load %arg10[%c2_143, %c2_144, %c2_145, %c0_146] : memref<4x6x6x64xf32, #tpu.memory_space<vmem>>, vector<2x3x3x64xf32>
    %221 = vector.extract_strided_slice %40 {offsets = [26, 0], sizes = [1, 64], strides = [1, 1]} : vector<27x64xf32> to vector<1x64xf32>
    %222 = vector.shape_cast %221 : vector<1x64xf32> to vector<64xf32>
    %223 = vector.shape_cast %222 : vector<64xf32> to vector<1x1x1x64xf32>
    %224 = vector.broadcast %223 : vector<1x1x1x64xf32> to vector<2x3x3x64xf32>
    %225 = arith.mulf %220, %224 : vector<2x3x3x64xf32>
    %226 = arith.addf %219, %225 : vector<2x3x3x64xf32>
    %227 = arith.addf %102, %164 : vector<2x3x3x64xf32>
    %228 = arith.addf %227, %226 : vector<2x3x3x64xf32>
    %229 = vector.extract_strided_slice %5 {offsets = [0, 0], sizes = [1, 64], strides = [1, 1]} : vector<33x64xf32> to vector<1x64xf32>
    %230 = vector.extract_strided_slice %228 {offsets = [0, 0, 0, 0], sizes = [1, 1, 1, 64], strides = [1, 1, 1, 1]} : vector<2x3x3x64xf32> to vector<1x1x1x64xf32>
    %231 = vector.shape_cast %230 : vector<1x1x1x64xf32> to vector<1x64xf32>
    %232 = vector.extract_strided_slice %228 {offsets = [0, 0, 2, 0], sizes = [1, 1, 1, 64], strides = [1, 1, 1, 1]} : vector<2x3x3x64xf32> to vector<1x1x1x64xf32>
    %233 = vector.shape_cast %232 : vector<1x1x1x64xf32> to vector<1x64xf32>
    %234 = vector.extract_strided_slice %228 {offsets = [0, 2, 0, 0], sizes = [1, 1, 1, 64], strides = [1, 1, 1, 1]} : vector<2x3x3x64xf32> to vector<1x1x1x64xf32>
    %235 = vector.shape_cast %234 : vector<1x1x1x64xf32> to vector<1x64xf32>
    %236 = vector.extract_strided_slice %228 {offsets = [0, 2, 2, 0], sizes = [1, 1, 1, 64], strides = [1, 1, 1, 1]} : vector<2x3x3x64xf32> to vector<1x1x1x64xf32>
    %237 = vector.shape_cast %236 : vector<1x1x1x64xf32> to vector<1x64xf32>
    %238 = vector.extract_strided_slice %228 {offsets = [1, 0, 0, 0], sizes = [1, 1, 1, 64], strides = [1, 1, 1, 1]} : vector<2x3x3x64xf32> to vector<1x1x1x64xf32>
    %239 = vector.shape_cast %238 : vector<1x1x1x64xf32> to vector<1x64xf32>
    %240 = vector.extract_strided_slice %228 {offsets = [1, 0, 2, 0], sizes = [1, 1, 1, 64], strides = [1, 1, 1, 1]} : vector<2x3x3x64xf32> to vector<1x1x1x64xf32>
    %241 = vector.shape_cast %240 : vector<1x1x1x64xf32> to vector<1x64xf32>
    %242 = vector.extract_strided_slice %228 {offsets = [1, 2, 0, 0], sizes = [1, 1, 1, 64], strides = [1, 1, 1, 1]} : vector<2x3x3x64xf32> to vector<1x1x1x64xf32>
    %243 = vector.shape_cast %242 : vector<1x1x1x64xf32> to vector<1x64xf32>
    %244 = vector.extract_strided_slice %228 {offsets = [1, 2, 2, 0], sizes = [1, 1, 1, 64], strides = [1, 1, 1, 1]} : vector<2x3x3x64xf32> to vector<1x1x1x64xf32>
    %245 = vector.shape_cast %244 : vector<1x1x1x64xf32> to vector<1x64xf32>
    %246 = tpu.concatenate %229, %231, %233, %235, %237, %239, %241, %243, %245 in 0 : vector<1x64xf32>, vector<1x64xf32>, vector<1x64xf32>, vector<1x64xf32>, vector<1x64xf32>, vector<1x64xf32>, vector<1x64xf32>, vector<1x64xf32>, vector<1x64xf32> -> vector<9x64xf32>
    %c0_147 = arith.constant 0 : index
    %c0_148 = arith.constant 0 : index
    %247 = vector.load %arg4[%c0_147, %c0_148] : memref<64x64xf32, #tpu.memory_space<vmem>>, vector<64x64xf32>
    %cst_149 = arith.constant dense<0.000000e+00> : vector<9x64xf32>
    %248 = tpu.matmul %246, %247, %cst_149 {dimension_numbers = #tpu.dot_dimension_numbers<[1], [0], [0], [1], [0, 0, 1, 1], [], []>} : vector<9x64xf32>, vector<64x64xf32>, vector<9x64xf32> -> vector<9x64xf32>
    %249 = arith.subf %246, %248 : vector<9x64xf32>
    %250 = arith.mulf %249, %249 : vector<9x64xf32>
    %cst_150 = arith.constant dense<0.000000e+00> : vector<9x64xf32>
    %251 = tpu.matmul %250, %247, %cst_150 {dimension_numbers = #tpu.dot_dimension_numbers<[1], [0], [0], [1], [0, 0, 1, 1], [], []>} : vector<9x64xf32>, vector<64x64xf32>, vector<9x64xf32> -> vector<9x64xf32>
    %cst_151 = arith.constant 9.99999974E-6 : f32
    %252 = vector.broadcast %cst_151 : f32 to vector<9x64xf32>
    %253 = arith.addf %251, %252 : vector<9x64xf32>
    %254 = math.rsqrt %253 : vector<9x64xf32>
    %255 = arith.mulf %249, %254 : vector<9x64xf32>
    %c0_152 = arith.constant 0 : index
    %c0_153 = arith.constant 0 : index
    %256 = vector.load %arg5[%c0_152, %c0_153] : memref<1x64xf32, #tpu.memory_space<vmem>>, vector<1x64xf32>
    %257 = vector.broadcast %256 : vector<1x64xf32> to vector<9x64xf32>
    %258 = arith.mulf %255, %257 : vector<9x64xf32>
    %c0_154 = arith.constant 0 : index
    %c0_155 = arith.constant 0 : index
    %259 = vector.load %arg6[%c0_154, %c0_155] : memref<1x64xf32, #tpu.memory_space<vmem>>, vector<1x64xf32>
    %260 = vector.broadcast %259 : vector<1x64xf32> to vector<9x64xf32>
    %261 = arith.addf %258, %260 : vector<9x64xf32>
    %262 = vector.extract_strided_slice %261 {offsets = [0, 0], sizes = [9, 32], strides = [1, 1]} : vector<9x64xf32> to vector<9x32xf32>
    %263 = vector.extract_strided_slice %261 {offsets = [0, 32], sizes = [9, 32], strides = [1, 1]} : vector<9x64xf32> to vector<9x32xf32>
    %264 = vector.extract_strided_slice %4 {offsets = [0, 0], sizes = [33, 8], strides = [1, 1]} : vector<33x32xf32> to vector<33x8xf32>
    %265 = vector.extract_strided_slice %262 {offsets = [0, 0], sizes = [9, 8], strides = [1, 1]} : vector<9x32xf32> to vector<9x8xf32>
    %266 = vector.extract_strided_slice %263 {offsets = [0, 0], sizes = [9, 8], strides = [1, 1]} : vector<9x32xf32> to vector<9x8xf32>
    %cst_156 = arith.constant dense<0.000000e+00> : vector<33x9xf32>
    %267 = tpu.matmul %264, %265, %cst_156 {dimension_numbers = #tpu.dot_dimension_numbers<[1], [1], [0], [0], [0, 0, 1, 0], [], []>} : vector<33x8xf32>, vector<9x8xf32>, vector<33x9xf32> -> vector<33x9xf32>
    %cst_157 = arith.constant dense<0xFF800000> : vector<33xf32>
    %268 = vector.multi_reduction <maximumf>, %267, %cst_157 [1] : vector<33x9xf32> to vector<33xf32>
    %269 = vector.shape_cast %268 : vector<33xf32> to vector<33x1xf32>
    %270 = vector.broadcast %269 : vector<33x1xf32> to vector<33x9xf32>
    %271 = arith.subf %267, %270 : vector<33x9xf32>
    %272 = math.exp %271 : vector<33x9xf32>
    %cst_158 = arith.constant dense<0.000000e+00> : vector<33xf32>
    %273 = vector.multi_reduction <add>, %272, %cst_158 [1] : vector<33x9xf32> to vector<33xf32>
    %274 = vector.shape_cast %273 : vector<33xf32> to vector<33x1xf32>
    %275 = vector.broadcast %274 : vector<33x1xf32> to vector<33x9xf32>
    %276 = arith.divf %272, %275 : vector<33x9xf32>
    %cst_159 = arith.constant dense<0.000000e+00> : vector<33x8xf32>
    %277 = tpu.matmul %276, %266, %cst_159 {dimension_numbers = #tpu.dot_dimension_numbers<[1], [0], [0], [1], [0, 0, 1, 1], [], []>} : vector<33x9xf32>, vector<9x8xf32>, vector<33x8xf32> -> vector<33x8xf32>
    %278 = vector.extract_strided_slice %4 {offsets = [0, 8], sizes = [33, 8], strides = [1, 1]} : vector<33x32xf32> to vector<33x8xf32>
    %279 = vector.extract_strided_slice %262 {offsets = [0, 8], sizes = [9, 8], strides = [1, 1]} : vector<9x32xf32> to vector<9x8xf32>
    %280 = vector.extract_strided_slice %263 {offsets = [0, 8], sizes = [9, 8], strides = [1, 1]} : vector<9x32xf32> to vector<9x8xf32>
    %cst_160 = arith.constant dense<0.000000e+00> : vector<33x9xf32>
    %281 = tpu.matmul %278, %279, %cst_160 {dimension_numbers = #tpu.dot_dimension_numbers<[1], [1], [0], [0], [0, 0, 1, 0], [], []>} : vector<33x8xf32>, vector<9x8xf32>, vector<33x9xf32> -> vector<33x9xf32>
    %cst_161 = arith.constant dense<0xFF800000> : vector<33xf32>
    %282 = vector.multi_reduction <maximumf>, %281, %cst_161 [1] : vector<33x9xf32> to vector<33xf32>
    %283 = vector.shape_cast %282 : vector<33xf32> to vector<33x1xf32>
    %284 = vector.broadcast %283 : vector<33x1xf32> to vector<33x9xf32>
    %285 = arith.subf %281, %284 : vector<33x9xf32>
    %286 = math.exp %285 : vector<33x9xf32>
    %cst_162 = arith.constant dense<0.000000e+00> : vector<33xf32>
    %287 = vector.multi_reduction <add>, %286, %cst_162 [1] : vector<33x9xf32> to vector<33xf32>
    %288 = vector.shape_cast %287 : vector<33xf32> to vector<33x1xf32>
    %289 = vector.broadcast %288 : vector<33x1xf32> to vector<33x9xf32>
    %290 = arith.divf %286, %289 : vector<33x9xf32>
    %cst_163 = arith.constant dense<0.000000e+00> : vector<33x8xf32>
    %291 = tpu.matmul %290, %280, %cst_163 {dimension_numbers = #tpu.dot_dimension_numbers<[1], [0], [0], [1], [0, 0, 1, 1], [], []>} : vector<33x9xf32>, vector<9x8xf32>, vector<33x8xf32> -> vector<33x8xf32>
    %292 = vector.extract_strided_slice %4 {offsets = [0, 16], sizes = [33, 8], strides = [1, 1]} : vector<33x32xf32> to vector<33x8xf32>
    %293 = vector.extract_strided_slice %262 {offsets = [0, 16], sizes = [9, 8], strides = [1, 1]} : vector<9x32xf32> to vector<9x8xf32>
    %294 = vector.extract_strided_slice %263 {offsets = [0, 16], sizes = [9, 8], strides = [1, 1]} : vector<9x32xf32> to vector<9x8xf32>
    %cst_164 = arith.constant dense<0.000000e+00> : vector<33x9xf32>
    %295 = tpu.matmul %292, %293, %cst_164 {dimension_numbers = #tpu.dot_dimension_numbers<[1], [1], [0], [0], [0, 0, 1, 0], [], []>} : vector<33x8xf32>, vector<9x8xf32>, vector<33x9xf32> -> vector<33x9xf32>
    %cst_165 = arith.constant dense<0xFF800000> : vector<33xf32>
    %296 = vector.multi_reduction <maximumf>, %295, %cst_165 [1] : vector<33x9xf32> to vector<33xf32>
    %297 = vector.shape_cast %296 : vector<33xf32> to vector<33x1xf32>
    %298 = vector.broadcast %297 : vector<33x1xf32> to vector<33x9xf32>
    %299 = arith.subf %295, %298 : vector<33x9xf32>
    %300 = math.exp %299 : vector<33x9xf32>
    %cst_166 = arith.constant dense<0.000000e+00> : vector<33xf32>
    %301 = vector.multi_reduction <add>, %300, %cst_166 [1] : vector<33x9xf32> to vector<33xf32>
    %302 = vector.shape_cast %301 : vector<33xf32> to vector<33x1xf32>
    %303 = vector.broadcast %302 : vector<33x1xf32> to vector<33x9xf32>
    %304 = arith.divf %300, %303 : vector<33x9xf32>
    %cst_167 = arith.constant dense<0.000000e+00> : vector<33x8xf32>
    %305 = tpu.matmul %304, %294, %cst_167 {dimension_numbers = #tpu.dot_dimension_numbers<[1], [0], [0], [1], [0, 0, 1, 1], [], []>} : vector<33x9xf32>, vector<9x8xf32>, vector<33x8xf32> -> vector<33x8xf32>
    %306 = vector.extract_strided_slice %4 {offsets = [0, 24], sizes = [33, 8], strides = [1, 1]} : vector<33x32xf32> to vector<33x8xf32>
    %307 = vector.extract_strided_slice %262 {offsets = [0, 24], sizes = [9, 8], strides = [1, 1]} : vector<9x32xf32> to vector<9x8xf32>
    %308 = vector.extract_strided_slice %263 {offsets = [0, 24], sizes = [9, 8], strides = [1, 1]} : vector<9x32xf32> to vector<9x8xf32>
    %cst_168 = arith.constant dense<0.000000e+00> : vector<33x9xf32>
    %309 = tpu.matmul %306, %307, %cst_168 {dimension_numbers = #tpu.dot_dimension_numbers<[1], [1], [0], [0], [0, 0, 1, 0], [], []>} : vector<33x8xf32>, vector<9x8xf32>, vector<33x9xf32> -> vector<33x9xf32>
    %cst_169 = arith.constant dense<0xFF800000> : vector<33xf32>
    %310 = vector.multi_reduction <maximumf>, %309, %cst_169 [1] : vector<33x9xf32> to vector<33xf32>
    %311 = vector.shape_cast %310 : vector<33xf32> to vector<33x1xf32>
    %312 = vector.broadcast %311 : vector<33x1xf32> to vector<33x9xf32>
    %313 = arith.subf %309, %312 : vector<33x9xf32>
    %314 = math.exp %313 : vector<33x9xf32>
    %cst_170 = arith.constant dense<0.000000e+00> : vector<33xf32>
    %315 = vector.multi_reduction <add>, %314, %cst_170 [1] : vector<33x9xf32> to vector<33xf32>
    %316 = vector.shape_cast %315 : vector<33xf32> to vector<33x1xf32>
    %317 = vector.broadcast %316 : vector<33x1xf32> to vector<33x9xf32>
    %318 = arith.divf %314, %317 : vector<33x9xf32>
    %cst_171 = arith.constant dense<0.000000e+00> : vector<33x8xf32>
    %319 = tpu.matmul %318, %308, %cst_171 {dimension_numbers = #tpu.dot_dimension_numbers<[1], [0], [0], [1], [0, 0, 1, 1], [], []>} : vector<33x9xf32>, vector<9x8xf32>, vector<33x8xf32> -> vector<33x8xf32>
    %320 = tpu.concatenate %277, %291, %305, %319 in 1 : vector<33x8xf32>, vector<33x8xf32>, vector<33x8xf32>, vector<33x8xf32> -> vector<33x32xf32>
    %c0_172 = arith.constant 0 : index
    %c0_173 = arith.constant 0 : index
    %321 = vector.load %arg7[%c0_172, %c0_173] : memref<32x32xf32, #tpu.memory_space<vmem>>, vector<32x32xf32>
    %cst_174 = arith.constant dense<0.000000e+00> : vector<33x32xf32>
    %322 = tpu.matmul %320, %321, %cst_174 {dimension_numbers = #tpu.dot_dimension_numbers<[1], [0], [0], [1], [0, 0, 1, 1], [], []>} : vector<33x32xf32>, vector<32x32xf32>, vector<33x32xf32> -> vector<33x32xf32>
    %c0_175 = arith.constant 0 : index
    %c0_176 = arith.constant 0 : index
    %323 = vector.load %arg8[%c0_175, %c0_176] : memref<1x32xf32, #tpu.memory_space<vmem>>, vector<1x32xf32>
    %324 = vector.broadcast %323 : vector<1x32xf32> to vector<33x32xf32>
    %325 = arith.addf %322, %324 : vector<33x32xf32>
    %c0_177 = arith.constant 0 : index
    %c0_178 = arith.constant 0 : index
    %c0_179 = arith.constant 0 : index
    %326 = vector.load %arg9[%c0_177, %c0_178, %c0_179] : memref<1x33x32xf32, #tpu.memory_space<vmem>>, vector<1x33x32xf32>
    %327 = vector.shape_cast %326 : vector<1x33x32xf32> to vector<33x32xf32>
    %328 = vector.shape_cast %325 : vector<33x32xf32> to vector<1x33x32xf32>
    tpu.vector_store %arg9[%c0_177, %c0_178, %c0_179], %328 {strides = array<i32>} : memref<1x33x32xf32, #tpu.memory_space<vmem>>, vector<1x33x32xf32>,
    return
  }
  func.func @transform_0(%arg0: i32) -> (i32, i32, i32) {
    %c0_i32 = arith.constant 0 : i32
    %c0_i32_0 = arith.constant 0 : i32
    %c0_i32_1 = arith.constant 0 : i32
    return %arg0, %c0_i32, %c0_i32_0 : i32, i32, i32
  }
  func.func @transform_1(%arg0: i32) -> (i32, i32) {
    %c0_i32 = arith.constant 0 : i32
    %c0_i32_0 = arith.constant 0 : i32
    %c0_i32_1 = arith.constant 0 : i32
    return %c0_i32, %c0_i32_0 : i32, i32
  }
  func.func @transform_2(%arg0: i32) -> (i32, i32) {
    %c0_i32 = arith.constant 0 : i32
    %c0_i32_0 = arith.constant 0 : i32
    %c0_i32_1 = arith.constant 0 : i32
    return %c0_i32, %c0_i32_0 : i32, i32
  }
  func.func @transform_3(%arg0: i32) -> (i32, i32) {
    %c0_i32 = arith.constant 0 : i32
    %c0_i32_0 = arith.constant 0 : i32
    %c0_i32_1 = arith.constant 0 : i32
    return %c0_i32, %c0_i32_0 : i32, i32
  }
  func.func @transform_4(%arg0: i32) -> (i32, i32) {
    %c0_i32 = arith.constant 0 : i32
    %c0_i32_0 = arith.constant 0 : i32
    %c0_i32_1 = arith.constant 0 : i32
    return %c0_i32, %c0_i32_0 : i32, i32
  }
  func.func @transform_5(%arg0: i32) -> (i32, i32) {
    %c0_i32 = arith.constant 0 : i32
    %c0_i32_0 = arith.constant 0 : i32
    %c0_i32_1 = arith.constant 0 : i32
    return %c0_i32, %c0_i32_0 : i32, i32
  }
  func.func @transform_6(%arg0: i32) -> (i32, i32) {
    %c0_i32 = arith.constant 0 : i32
    %c0_i32_0 = arith.constant 0 : i32
    %c0_i32_1 = arith.constant 0 : i32
    return %c0_i32, %c0_i32_0 : i32, i32
  }
  func.func @transform_7(%arg0: i32) -> (i32, i32) {
    %c0_i32 = arith.constant 0 : i32
    %c0_i32_0 = arith.constant 0 : i32
    %c0_i32_1 = arith.constant 0 : i32
    return %c0_i32, %c0_i32_0 : i32, i32
  }
  func.func @transform_8(%arg0: i32) -> (i32, i32, i32) {
    %c0_i32 = arith.constant 0 : i32
    %c0_i32_0 = arith.constant 0 : i32
    %c0_i32_1 = arith.constant 0 : i32
    return %arg0, %c0_i32, %c0_i32_0 : i32, i32, i32
  }
}

</mosaic_0001>

<llo_original>
// kernel: tpu_custom_call.1
$region0: #{tpu_custom_call.1}
  #allocation0 [shape = 'u32[]', space=smem, size = 0x4, offset = 0x4, fixed_abs, tag = 'smem constant byte address 0x4 - core index']
  #allocation1 [shape = 'u32[72,128]{1,0:T(1,128)}', space=vmem, size = 0x9000, scoped, tag = 'internal scratch']
  #allocation2 [shape = 'f32[4,6,6,64]{3,2,1,0:T(8,128)}', space=vmem, size = 0x18000, scoped, tag = 'scratch operand']
  %s0 = inlined_call_operand.vmem [shape: f32[2,33,32], index: 0, kind: input, shape index: {}]
  %s1 = inlined_call_operand.vmem [shape: f32[32,96], index: 1, kind: input, shape index: {}]
  %s2 = inlined_call_operand.vmem [shape: f32[27,64], index: 2, kind: input, shape index: {}]
  %s3 = inlined_call_operand.vmem [shape: f32[64,64], index: 3, kind: input, shape index: {}]
  %s4 = inlined_call_operand.vmem [shape: f32[1,64], index: 4, kind: input, shape index: {}]
  %s5 = inlined_call_operand.vmem [shape: f32[1,64], index: 5, kind: input, shape index: {}]
  %s6 = inlined_call_operand.hbm [shape: f32[32,32], index: 6, kind: input, shape index: {}]
  %s7 = inlined_call_operand.vmem [shape: f32[1,32], index: 7, kind: input, shape index: {}]
  %s8 = inlined_call_operand.vmem [shape: f32[2,33,32], index: 8, kind: output, shape index: {}]
  %s9 = sld [smem:[#allocation0]]
  $region69: #{tpu_custom_call.1} parent=0
    _
  %s11 = ssub.s32 1, %s9
  %s12 = scalar_select 0, %s11, %s9
  $region1: #{tpu_custom_call.1} parent=0
    #allocation3 [shape = 'u8[16384]{0}', space=vmem, size = 0x4000, scoped, tag = 'input window, operand 6, single buffered']
    #allocation4 [shape = 's32[2]{0}', space=sflag, size = 0x8, scoped, tag = 'scoped memory for tpu_custom_call.1']
    %13 = vsyncpa [#allocation4], 0
    loop: start=0, step=1, limit=4
    $region2: #{tpu_custom_call.1} parent=1 // loop_pre_header
      _
    $region3: #{tpu_custom_call.1} parent=1 // loop_header
      %s15 = sphi 0, %s19
      %p16 = scmp.ge.s32.totalorder %s15, 4
      %s25 = sphi 0, %s27
      %s28 = sphi 0, %s25
      %s29 = sphi 0, %s28
      %s45 = sphi 0, %s29
      %s49 = sphi 0, %s49
      %s51 = sphi 0, %s49
      %s52 = sphi 0, %s51
      %s66 = sphi 0, %s52
      %s70 = sphi 0, %s70
      %s72 = sphi 0, %s70
      %s73 = sphi 0, %s72
      %s87 = sphi 0, %s73
      %s91 = sphi 0, %s91
      %s93 = sphi 0, %s91
      %s94 = sphi 0, %s93
      %s108 = sphi 0, %s94
      %s112 = sphi 0, %s112
      %s114 = sphi 0, %s112
      %s115 = sphi 0, %s114
      %s129 = sphi 0, %s115
      %s133 = sphi 0, %s133
      %s135 = sphi 0, %s133
      %s136 = sphi 0, %s135
      %s150 = sphi 0, %s136
      %s154 = sphi 0, %s154
      %s156 = sphi 0, %s154
      %s157 = sphi 0, %s156
      %s171 = sphi 0, %s157
      %s175 = sphi 0, %s175
      %s177 = sphi 0, %s175
      %s178 = sphi 0, %s177
      %s192 = sphi 0, %s178
      %s198 = sphi 0, %s200
      %s201 = sphi 0, %s198
      %s202 = sphi 0, %s201
      %s218 = sphi 0, %s202
    $region4: #{tpu_custom_call.1} parent=1 // loop_header_branch
      %18 = sbr.rel (%p16) target = $region8
    $region5: #{tpu_custom_call.1} parent=1 // loop_body
      %s20 = ssub.s32 %s15, 1
      %s21 = ssub.s32 %s15, 2
      %s22 = sadd.s32 %s15, 1
      %s23 = ssub.s32 %s15, %s22
      %p24 = scmp.eq.s32.totalorder %s23, 0
      %s26 = sadd.s32 %s25, 1
      %s27 = scalar_select %p24, %s25, %s26
      %p30 = pneg %p24
      %p31 = scmp.eq.s32.totalorder %s15, 1
      %p32 = por %p30, %p31
      %p33 = scmp.ne.s32.totalorder %s25, %s28
      %p34 = scmp.eq.s32.totalorder %s15, 0
      %p35 = por %p33, %p34
      %p36 = scmp.ne.s32.totalorder %s25, %s28
      %p37 = scmp.eq.s32.totalorder %s20, 1
      %p38 = por %p36, %p37
      %p39 = scmp.ne.s32.totalorder %s28, %s29
      %p40 = scmp.eq.s32.totalorder %s20, 0
      %p41 = por %p39, %p40
      %p42 = scmp.ne.s32.totalorder %s28, %s29
      %p43 = scmp.eq.s32.totalorder %s21, 1
      %p44 = por %p42, %p43
      %p46 = scmp.ne.s32.totalorder %s29, %s45
      %p47 = scmp.eq.s32.totalorder %s21, 0
      %p48 = por %p46, %p47
      %s50 = sadd.s32 %s49, 1
      %p53 = scmp.eq.s32.totalorder %s15, 1
      %p54 = scmp.ne.s32.totalorder %s49, %s51
      %p55 = scmp.eq.s32.totalorder %s15, 0
      %p56 = por %p54, %p55
      %p57 = scmp.ne.s32.totalorder %s49, %s51
      %p58 = scmp.eq.s32.totalorder %s20, 1
      %p59 = por %p57, %p58
      %p60 = scmp.ne.s32.totalorder %s51, %s52
      %p61 = scmp.eq.s32.totalorder %s20, 0
      %p62 = por %p60, %p61
      %p63 = scmp.ne.s32.totalorder %s51, %s52
      %p64 = scmp.eq.s32.totalorder %s21, 1
      %p65 = por %p63, %p64
      %p67 = scmp.ne.s32.totalorder %s52, %s66
      %p68 = scmp.eq.s32.totalorder %s21, 0
      %p69 = por %p67, %p68
      %s71 = sadd.s32 %s70, 1
      %p74 = scmp.eq.s32.totalorder %s15, 1
      %p75 = scmp.ne.s32.totalorder %s70, %s72
      %p76 = scmp.eq.s32.totalorder %s15, 0
      %p77 = por %p75, %p76
      %p78 = scmp.ne.s32.totalorder %s70, %s72
      %p79 = scmp.eq.s32.totalorder %s20, 1
      %p80 = por %p78, %p79
      %p81 = scmp.ne.s32.totalorder %s72, %s73
      %p82 = scmp.eq.s32.totalorder %s20, 0
      %p83 = por %p81, %p82
      %p84 = scmp.ne.s32.totalorder %s72, %s73
      %p85 = scmp.eq.s32.totalorder %s21, 1
      %p86 = por %p84, %p85
      %p88 = scmp.ne.s32.totalorder %s73, %s87
      %p89 = scmp.eq.s32.totalorder %s21, 0
      %p90 = por %p88, %p89
      %s92 = sadd.s32 %s91, 1
      %p95 = scmp.eq.s32.totalorder %s15, 1
      %p96 = scmp.ne.s32.totalorder %s91, %s93
      %p97 = scmp.eq.s32.totalorder %s15, 0
      %p98 = por %p96, %p97
      %p99 = scmp.ne.s32.totalorder %s91, %s93
      %p100 = scmp.eq.s32.totalorder %s20, 1
      %p101 = por %p99, %p100
      %p102 = scmp.ne.s32.totalorder %s93, %s94
      %p103 = scmp.eq.s32.totalorder %s20, 0
      %p104 = por %p102, %p103
      %p105 = scmp.ne.s32.totalorder %s93, %s94
      %p106 = scmp.eq.s32.totalorder %s21, 1
      %p107 = por %p105, %p106
      %p109 = scmp.ne.s32.totalorder %s94, %s108
      %p110 = scmp.eq.s32.totalorder %s21, 0
      %p111 = por %p109, %p110
      %s113 = sadd.s32 %s112, 1
      %p116 = scmp.eq.s32.totalorder %s15, 1
      %p117 = scmp.ne.s32.totalorder %s112, %s114
      %p118 = scmp.eq.s32.totalorder %s15, 0
      %p119 = por %p117, %p118
      %p120 = scmp.ne.s32.totalorder %s112, %s114
      %p121 = scmp.eq.s32.totalorder %s20, 1
      %p122 = por %p120, %p121
      %p123 = scmp.ne.s32.totalorder %s114, %s115
      %p124 = scmp.eq.s32.totalorder %s20, 0
      %p125 = por %p123, %p124
      %p126 = scmp.ne.s32.totalorder %s114, %s115
      %p127 = scmp.eq.s32.totalorder %s21, 1
      %p128 = por %p126, %p127
      %p130 = scmp.ne.s32.totalorder %s115, %s129
      %p131 = scmp.eq.s32.totalorder %s21, 0
      %p132 = por %p130, %p131
      %s134 = sadd.s32 %s133, 1
      %p137 = scmp.eq.s32.totalorder %s15, 1
      %p138 = scmp.ne.s32.totalorder %s133, %s135
      %p139 = scmp.eq.s32.totalorder %s15, 0
      %p140 = por %p138, %p139
      %p141 = scmp.ne.s32.totalorder %s133, %s135
      %p142 = scmp.eq.s32.totalorder %s20, 1
      %p143 = por %p141, %p142
      %p144 = scmp.ne.s32.totalorder %s135, %s136
      %p145 = scmp.eq.s32.totalorder %s20, 0
      %p146 = por %p144, %p145
      %p147 = scmp.ne.s32.totalorder %s135, %s136
      %p148 = scmp.eq.s32.totalorder %s21, 1
      %p149 = por %p147, %p148
      %p151 = scmp.ne.s32.totalorder %s136, %s150
      %p152 = scmp.eq.s32.totalorder %s21, 0
      %p153 = por %p151, %p152
      %s155 = sadd.s32 %s154, 1
      %p158 = scmp.eq.s32.totalorder %s15, 1
      %p159 = scmp.ne.s32.totalorder %s154, %s156
      %p160 = scmp.eq.s32.totalorder %s15, 0
      %p161 = por %p159, %p160
      %p162 = scmp.ne.s32.totalorder %s154, %s156
      %p163 = scmp.eq.s32.totalorder %s20, 1
      %p164 = por %p162, %p163
      %p165 = scmp.ne.s32.totalorder %s156, %s157
      %p166 = scmp.eq.s32.totalorder %s20, 0
      %p167 = por %p165, %p166
      %p168 = scmp.ne.s32.totalorder %s156, %s157
      %p169 = scmp.eq.s32.totalorder %s21, 1
      %p170 = por %p168, %p169
      %p172 = scmp.ne.s32.totalorder %s157, %s171
      %p173 = scmp.eq.s32.totalorder %s21, 0
      %p174 = por %p172, %p173
      %s176 = sadd.s32 %s175, 1
      %p179 = scmp.eq.s32.totalorder %s15, 1
      %p180 = scmp.ne.s32.totalorder %s175, %s177
      %p181 = scmp.eq.s32.totalorder %s15, 0
      %p182 = por %p180, %p181
      %p183 = scmp.ne.s32.totalorder %s175, %s177
      %p184 = scmp.eq.s32.totalorder %s20, 1
      %p185 = por %p183, %p184
      %p186 = scmp.ne.s32.totalorder %s177, %s178
      %p187 = scmp.eq.s32.totalorder %s20, 0
      %p188 = por %p186, %p187
      %p189 = scmp.ne.s32.totalorder %s177, %s178
      %p190 = scmp.eq.s32.totalorder %s21, 1
      %p191 = por %p189, %p190
      %p193 = scmp.ne.s32.totalorder %s178, %s192
      %p194 = scmp.eq.s32.totalorder %s21, 0
      %p195 = por %p193, %p194
      %s196 = ssub.s32 %s15, %s22
      %p197 = scmp.eq.s32.totalorder %s196, 0
      %s199 = sadd.s32 %s198, 1
      %s200 = scalar_select %p197, %s198, %s199
      %p203 = pneg %p197
      %p204 = scmp.eq.s32.totalorder %s15, 1
      %p205 = por %p203, %p204
      %p206 = scmp.ne.s32.totalorder %s198, %s201
      %p207 = scmp.eq.s32.totalorder %s15, 0
      %p208 = por %p206, %p207
      %p209 = scmp.ne.s32.totalorder %s198, %s201
      %p210 = scmp.eq.s32.totalorder %s20, 1
      %p211 = por %p209, %p210
      %p212 = scmp.ne.s32.totalorder %s201, %s202
      %p213 = scmp.eq.s32.totalorder %s20, 0
      %p214 = por %p212, %p213
      %p215 = scmp.ne.s32.totalorder %s201, %s202
      %p216 = scmp.eq.s32.totalorder %s21, 1
      %p217 = por %p215, %p216
      %p219 = scmp.ne.s32.totalorder %s202, %s218
      %p220 = scmp.eq.s32.totalorder %s21, 0
      %p221 = por %p219, %p220
      %p222 = scmp.le.s32.totalorder 1, %s15
      %p223 = scmp.lt.s32.totalorder %s15, 3
      %p224 = pnand %p222, %p223
      %p225 = pneg %p224
      // Predicated region
      $region9: #{tpu_custom_call.1} parent=5 // pred_check
        _
      $region10: #{tpu_custom_call.1} parent=5 // pred_check_branch
        %227 = sbr.rel (%p224) target = $region12
      $region11: #{tpu_custom_call.1} parent=5 // pred_region
        %s228 = ssub.s32 %s15, 1
        // Predicated region
        $region13: #{tpu_custom_call.1} parent=11 // pred_check
          %p229 = pneg %p62
        $region14: #{tpu_custom_call.1} parent=11 // pred_check_branch
          %231 = sbr.rel (%p229) target = $region16
        $region15: #{tpu_custom_call.1} parent=11 // pred_region
          _
        $region16: #{tpu_custom_call.1} parent=11 // pred_fallthru
          _
        // Predicated region
        $region17: #{tpu_custom_call.1} parent=11 // pred_check
          %p232 = pneg %p83
        $region18: #{tpu_custom_call.1} parent=11 // pred_check_branch
          %234 = sbr.rel (%p232) target = $region20
        $region19: #{tpu_custom_call.1} parent=11 // pred_region
          _
        $region20: #{tpu_custom_call.1} parent=11 // pred_fallthru
          _
        // Predicated region
        $region21: #{tpu_custom_call.1} parent=11 // pred_check
          %p235 = pneg %p104
        $region22: #{tpu_custom_call.1} parent=11 // pred_check_branch
          %237 = sbr.rel (%p235) target = $region24
        $region23: #{tpu_custom_call.1} parent=11 // pred_region
          _
        $region24: #{tpu_custom_call.1} parent=11 // pred_fallthru
          _
        // Predicated region
        $region25: #{tpu_custom_call.1} parent=11 // pred_check
          %p238 = pneg %p125
        $region26: #{tpu_custom_call.1} parent=11 // pred_check_branch
          %240 = sbr.rel (%p238) target = $region28
        $region27: #{tpu_custom_call.1} parent=11 // pred_region
          _
        $region28: #{tpu_custom_call.1} parent=11 // pred_fallthru
          _
        // Predicated region
        $region29: #{tpu_custom_call.1} parent=11 // pred_check
          %p241 = pneg %p146
        $region30: #{tpu_custom_call.1} parent=11 // pred_check_branch
          %243 = sbr.rel (%p241) target = $region32
        $region31: #{tpu_custom_call.1} parent=11 // pred_region
          _
        $region32: #{tpu_custom_call.1} parent=11 // pred_fallthru
          _
        // Predicated region
        $region33: #{tpu_custom_call.1} parent=11 // pred_check
          %p244 = pneg %p167
        $region34: #{tpu_custom_call.1} parent=11 // pred_check_branch
          %246 = sbr.rel (%p244) target = $region36
        $region35: #{tpu_custom_call.1} parent=11 // pred_region
          %248 = vsyncadd [#allocation4], 0
          %s249 = sshll.u32 %s6, 4
          %s250 = int_to_ptr.hbm [resolvable:$true] %s249
          %s251 = sshll.u32 [#allocation3], 4
          %s252 = int_to_ptr.vmem [resolvable:$true] %s251
          %257 = dma.hbm_to_vmem [thread:$0]  %s250, 512, %s252, [#allocation4], 128, 128, 8
        $region36: #{tpu_custom_call.1} parent=11 // pred_fallthru
          _
        // Predicated region
        $region37: #{tpu_custom_call.1} parent=11 // pred_check
          %p258 = pneg %p188
        $region38: #{tpu_custom_call.1} parent=11 // pred_check_branch
          %260 = sbr.rel (%p258) target = $region40
        $region39: #{tpu_custom_call.1} parent=11 // pred_region
          _
        $region40: #{tpu_custom_call.1} parent=11 // pred_fallthru
          _
      $region12: #{tpu_custom_call.1} parent=5 // pred_fallthru
        _
      %p261 = scmp.lt.s32.totalorder %s15, 2
      // Predicated region
      $region41: #{tpu_custom_call.1} parent=5 // pred_check
        %p262 = pneg %p261
      $region42: #{tpu_custom_call.1} parent=5 // pred_check_branch
        %264 = sbr.rel (%p262) target = $region44
      $region43: #{tpu_custom_call.1} parent=5 // pred_region
        // Predicated region
        $region45: #{tpu_custom_call.1} parent=43 // pred_check
          %p265 = pneg %p35
        $region46: #{tpu_custom_call.1} parent=43 // pred_check_branch
          %267 = sbr.rel (%p265) target = $region48
        $region47: #{tpu_custom_call.1} parent=43 // pred_region
          %p268 = scmp.lt.s32.totalorder %s15, 1
          %s269 = scalar_select %p268, %s15, 1
          %s270 = smul.addr %s269, 5
          %s271 = smul.addr %s270, 8
          %s272 = scalar_lea.vmem %s0, %s271
        $region48: #{tpu_custom_call.1} parent=43 // pred_fallthru
          _
      $region44: #{tpu_custom_call.1} parent=5 // pred_fallthru
        _
      %p273 = scmp.le.s32.totalorder 1, %s15
      %p274 = scmp.lt.s32.totalorder %s15, 3
      %p275 = pnand %p273, %p274
      %p276 = pneg %p275
      // Predicated region
      $region49: #{tpu_custom_call.1} parent=5 // pred_check
        _
      $region50: #{tpu_custom_call.1} parent=5 // pred_check_branch
        %278 = sbr.rel (%p275) target = $region52
      $region51: #{tpu_custom_call.1} parent=5 // pred_region
        %s279 = ssub.s32 %s15, 1
        // Predicated region
        $region53: #{tpu_custom_call.1} parent=51 // pred_check
          %p280 = pneg %p167
        $region54: #{tpu_custom_call.1} parent=51 // pred_check_branch
          %282 = sbr.rel (%p280) target = $region56
        $region55: #{tpu_custom_call.1} parent=51 // pred_region
          %284 = dma.done [#allocation4], 512
        $region56: #{tpu_custom_call.1} parent=51 // pred_fallthru
          _
        %p285 = scmp.lt.s32.totalorder %s20, 1
        %s286 = scalar_select %p285, %s20, 1
        %s287 = smul.addr %s286, 5
        %s288 = smul.addr %s287, 8
        %s289 = scalar_lea.vmem %s0, %s288
        %p290 = pneg %p41
        %p291 = pneg %p38
        %p292 = pneg %p62
        %p293 = pneg %p59
        %p294 = pneg %p83
        %p295 = pneg %p80
        %p296 = pneg %p104
        %p297 = pneg %p101
        %p298 = pneg %p125
        %p299 = pneg %p122
        %p300 = pneg %p146
        %p301 = pneg %p143
        %p302 = pneg %p167
        %p303 = pneg %p164
        %p304 = pneg %p188
        %p305 = pneg %p185
        %p306 = pneg %p214
        %p307 = pneg %p211
        %p308 = scmp.lt.s32.totalorder %s20, 1
        %s309 = scalar_select %p308, %s20, 1
        %s310 = smul.addr %s309, 5
        %s311 = smul.addr %s310, 8
        %s312 = scalar_lea.vmem %s8, %s311
        %p313 = scmp.lt.s32.totalorder %s20, 1
        %s314 = scalar_select %p313, %s20, 1
        %s315 = smul.addr %s314, 5
        %s316 = smul.addr %s315, 8
        %s317 = scalar_lea.vmem %s0, %s316
        %p318 = scmp.lt.s32.totalorder %s20, 1
        %s319 = scalar_select %p318, %s20, 1
        %s320 = smul.addr %s319, 5
        %s321 = smul.addr %s320, 8
        %s322 = scalar_lea.vmem %s8, %s321
        %v323 = vld [vmem:[%s317] sm:$0xff]
        %v324 = vld [vmem:[%s317 + $0x8] sm:$0xff]
        %v325 = vld [vmem:[%s317 + $0x10] sm:$0xff]
        %v326 = vld [vmem:[%s317 + $0x18] sm:$0xff]
        %v327 = vld [vmem:[%s317 + $0x20] sm:$0x1]
        %v328 = vld [vmem:[%s1] sm:$0xff]
        %v329 = vld [vmem:[%s1 + $0x8] sm:$0xff]
        %v330 = vld [vmem:[%s1 + $0x10] sm:$0xff]
        %v331 = vld [vmem:[%s1 + $0x18] sm:$0xff]
        %vm332 = vcmask 261120
        %v334 = vsel %vm332, %v323, 0
        %v337 = vsel %vm332, %v324, 0
        %v340 = vsel %vm332, %v325, 0
        %v343 = vsel %vm332, %v326, 0
        %v346 = vsel %vm332, %v327, 0
        %348 = vmatpush.msra.mxu0 0.0
        %349 = vmatpush.msra.mxu0 0.0
        %350 = vmatpush.msra.mxu0 0.0
        %351 = vmatpush.msra.mxu0 0.0
        %352 = vmatpush.msra.mxu0 0.0
        %353 = vmatpush.msra.mxu0 0.0
        %354 = vmatpush.msra.mxu0 0.0
        %355 = vmatpush.msra.mxu0 0.0
        %356 = vmatpush.msra.mxu0 0.0
        %357 = vmatpush.msra.mxu0 0.0
        %358 = vmatpush.msra.mxu0 0.0
        %359 = vmatpush.msra.mxu0 0.0
        %360 = vmatpush.msra.mxu0 %v331
        %361 = vmatpush.msra.mxu0 %v330
        %362 = vmatpush.msra.mxu0 %v329
        %363 = vmatpush.msra.mxu0 %v328
        %364 = vmatmul.f32.gmra.mxu0 %v334
        %v365 = vpop.f32.mrf.mxu0
        %v366 = vadd.f32 0.0, %v365
        %367 = vmatmul.f32.gmra.mxu0 %v337
        %v368 = vpop.f32.mrf.mxu0
        %v369 = vadd.f32 0.0, %v368
        %370 = vmatmul.f32.gmra.mxu0 %v340
        %v371 = vpop.f32.mrf.mxu0
        %v372 = vadd.f32 0.0, %v371
        %373 = vmatmul.f32.gmra.mxu0 %v343
        %v374 = vpop.f32.mrf.mxu0
        %v375 = vadd.f32 0.0, %v374
        %376 = vmatmul.f32.gmra.mxu0 %v346
        %v377 = vpop.f32.mrf.mxu0
        %v378 = vadd.f32 0.0, %v377
        %379 = vdwg.mxu0
        %vm380 = vcmask 521216
        %381 = vst.msk [vmem:[#allocation2] sm:$0x3f] %vm380, 0.0
        %382 = vst.msk [vmem:[#allocation2 + $0x8] sm:$0x3f] %vm380, 0.0
        %383 = vst.msk [vmem:[#allocation2 + $0x10] sm:$0x3f] %vm380, 0.0
        %384 = vst.msk [vmem:[#allocation2 + $0x18] sm:$0x3f] %vm380, 0.0
        %385 = vst.msk [vmem:[#allocation2 + $0x20] sm:$0x3f] %vm380, 0.0
        %386 = vst.msk [vmem:[#allocation2 + $0x28] sm:$0x3f] %vm380, 0.0
        %387 = vst.msk [vmem:[#allocation2 + $0x30] sm:$0x3f] %vm380, 0.0
        %388 = vst.msk [vmem:[#allocation2 + $0x38] sm:$0x3f] %vm380, 0.0
        %389 = vst.msk [vmem:[#allocation2 + $0x40] sm:$0x3f] %vm380, 0.0
        %390 = vst.msk [vmem:[#allocation2 + $0x48] sm:$0x3f] %vm380, 0.0
        %391 = vst.msk [vmem:[#allocation2 + $0x50] sm:$0x3f] %vm380, 0.0
        %392 = vst.msk [vmem:[#allocation2 + $0x58] sm:$0x3f] %vm380, 0.0
        %393 = vst.msk [vmem:[#allocation2 + $0x60] sm:$0x3f] %vm380, 0.0
        %394 = vst.msk [vmem:[#allocation2 + $0x68] sm:$0x3f] %vm380, 0.0
        %395 = vst.msk [vmem:[#allocation2 + $0x70] sm:$0x3f] %vm380, 0.0
        %396 = vst.msk [vmem:[#allocation2 + $0x78] sm:$0x3f] %vm380, 0.0
        %397 = vst.msk [vmem:[#allocation2 + $0x80] sm:$0x3f] %vm380, 0.0
        %398 = vst.msk [vmem:[#allocation2 + $0x88] sm:$0x3f] %vm380, 0.0
        %399 = vst.msk [vmem:[#allocation2 + $0x90] sm:$0x3f] %vm380, 0.0
        %400 = vst.msk [vmem:[#allocation2 + $0x98] sm:$0x3f] %vm380, 0.0
        %401 = vst.msk [vmem:[#allocation2 + $0xa0] sm:$0x3f] %vm380, 0.0
        %402 = vst.msk [vmem:[#allocation2 + $0xa8] sm:$0x3f] %vm380, 0.0
        %403 = vst.msk [vmem:[#allocation2 + $0xb0] sm:$0x3f] %vm380, 0.0
        %404 = vst.msk [vmem:[#allocation2 + $0xb8] sm:$0x3f] %vm380, 0.0
        %406 = vrot.lane.b32.xlu0 %v366, 96
        %v407 = vpop.permute.xlu0 %406
        %s409 = scalar_lea.vmem [#allocation2], 56
        %vm410 = vcmask 520193
        %411 = vst.msk [vmem:[%s409] sm:$0x1e] %vm410, %v407
        %413 = vrot.lane.b32.xlu0 %v369, 96
        %v414 = vpop.permute.xlu0 %413
        %s416 = scalar_lea.vmem [#allocation2], 64
        %vm417 = vcmask 523269
        %418 = vst.msk [vmem:[%s416 - $0x4] sm:$0xe0] %vm417, %v407
        %vm419 = vcmask 516096
        %420 = vst.msk [vmem:[%s416 + $0x4] sm:$0x1] %vm419, %v414
        %s421 = scalar_lea.vmem [#allocation2], 72
        %422 = vst.msk [vmem:[%s421] sm:$0x1e] %vm410, %v414
        %424 = vrot.lane.b32.xlu0 %v372, 96
        %v425 = vpop.permute.xlu0 %424
        %s427 = scalar_lea.vmem [#allocation2], 80
        %428 = vst.msk [vmem:[%s427 - $0x4] sm:$0xe0] %vm417, %v414
        %429 = vst.msk [vmem:[%s427 + $0x4] sm:$0x1] %vm419, %v425
        %s430 = scalar_lea.vmem [#allocation2], 104
        %431 = vst.msk [vmem:[%s430] sm:$0x1e] %vm410, %v425
        %433 = vrot.lane.b32.xlu0 %v375, 96
        %v434 = vpop.permute.xlu0 %433
        %s436 = scalar_lea.vmem [#allocation2], 112
        %437 = vst.msk [vmem:[%s436 - $0x4] sm:$0xe0] %vm417, %v425
        %438 = vst.msk [vmem:[%s436 + $0x4] sm:$0x1] %vm419, %v434
        %s439 = scalar_lea.vmem [#allocation2], 120
        %440 = vst.msk [vmem:[%s439] sm:$0x1e] %vm410, %v434
        %442 = vrot.lane.b32.xlu0 %v378, 96
        %v443 = vpop.permute.xlu0 %442
        %s445 = scalar_lea.vmem [#allocation2], 128
        %446 = vst.msk [vmem:[%s445 - $0x4] sm:$0xe0] %vm417, %v434
        %447 = vst.msk [vmem:[%s445 + $0x4] sm:$0x1] %vm419, %v443
        %v448 = vld [vmem:[%s2] sm:$0xff]
        %v449 = vld [vmem:[%s2 + $0x8] sm:$0xff]
        %v450 = vld [vmem:[%s2 + $0x10] sm:$0xff]
        %v451 = vld [vmem:[%s2 + $0x18] sm:$0x7]
        %v452 = vld [vmem:[#allocation2] sm:$0x7]
        %v453 = vld [vmem:[#allocation2 + $0x10] sm:$0x7]
        %v454 = vld [vmem:[#allocation2 + $0x30] sm:$0x7]
        %v455 = vld [vmem:[#allocation2 + $0x40] sm:$0x7]
        %v456 = vperm.slane %v448, 0
        %v457 = vmul.f32 %v452, %v456
        %v458 = vmul.f32 %v453, %v456
        %v459 = vmul.f32 %v454, %v456
        %v460 = vmul.f32 %v455, %v456
        %v461 = vld [vmem:[#allocation2 + $0x1] sm:$0x7]
        %v462 = vld [vmem:[#allocation2 + $0x11] sm:$0x7]
        %v463 = vld [vmem:[#allocation2 + $0x31] sm:$0x7]
        %v464 = vld [vmem:[#allocation2 + $0x41] sm:$0x7]
        %v465 = vperm.slane %v448, 1
        %v466 = vmul.f32 %v461, %v465
        %v467 = vmul.f32 %v462, %v465
        %v468 = vmul.f32 %v463, %v465
        %v469 = vmul.f32 %v464, %v465
        %v470 = vadd.f32 %v457, %v466
        %v471 = vadd.f32 %v458, %v467
        %v472 = vadd.f32 %v459, %v468
        %v473 = vadd.f32 %v460, %v469
        %v474 = vld [vmem:[#allocation2 + $0x2] sm:$0x7]
        %v475 = vld [vmem:[#allocation2 + $0x12] sm:$0x7]
        %v476 = vld [vmem:[#allocation2 + $0x32] sm:$0x7]
        %v477 = vld [vmem:[#allocation2 + $0x42] sm:$0x7]
        %v478 = vperm.slane %v448, 2
        %v479 = vmul.f32 %v474, %v478
        %v480 = vmul.f32 %v475, %v478
        %v481 = vmul.f32 %v476, %v478
        %v482 = vmul.f32 %v477, %v478
        %v483 = vadd.f32 %v470, %v479
        %v484 = vadd.f32 %v471, %v480
        %v485 = vadd.f32 %v472, %v481
        %v486 = vadd.f32 %v473, %v482
        %s487 = scalar_lea.vmem [#allocation2], 8
        %v488 = vld [vmem:[%s487] sm:$0x7]
        %v489 = vld [vmem:[%s487 + $0x10] sm:$0x7]
        %v490 = vld [vmem:[%s487 + $0x30] sm:$0x7]
        %v491 = vld [vmem:[%s487 + $0x40] sm:$0x7]
        %v492 = vperm.slane %v448, 3
        %v493 = vmul.f32 %v488, %v492
        %v494 = vmul.f32 %v489, %v492
        %v495 = vmul.f32 %v490, %v492
        %v496 = vmul.f32 %v491, %v492
        %v497 = vadd.f32 %v483, %v493
        %v498 = vadd.f32 %v484, %v494
        %v499 = vadd.f32 %v485, %v495
        %v500 = vadd.f32 %v486, %v496
        %v501 = vld [vmem:[%s487 + $0x1] sm:$0x7]
        %v502 = vld [vmem:[%s487 + $0x11] sm:$0x7]
        %v503 = vld [vmem:[%s487 + $0x31] sm:$0x7]
        %v504 = vld [vmem:[%s487 + $0x41] sm:$0x7]
        %v505 = vperm.slane %v448, 4
        %v506 = vmul.f32 %v501, %v505
        %v507 = vmul.f32 %v502, %v505
        %v508 = vmul.f32 %v503, %v505
        %v509 = vmul.f32 %v504, %v505
        %v510 = vadd.f32 %v497, %v506
        %v511 = vadd.f32 %v498, %v507
        %v512 = vadd.f32 %v499, %v508
        %v513 = vadd.f32 %v500, %v509
        %v514 = vld [vmem:[%s487 + $0x2] sm:$0x7]
        %v515 = vld [vmem:[%s487 + $0x12] sm:$0x7]
        %v516 = vld [vmem:[%s487 + $0x32] sm:$0x7]
        %v517 = vld [vmem:[%s487 + $0x42] sm:$0x7]
        %v518 = vperm.slane %v448, 5
        %v519 = vmul.f32 %v514, %v518
        %v520 = vmul.f32 %v515, %v518
        %v521 = vmul.f32 %v516, %v518
        %v522 = vmul.f32 %v517, %v518
        %v523 = vadd.f32 %v510, %v519
        %v524 = vadd.f32 %v511, %v520
        %v525 = vadd.f32 %v512, %v521
        %v526 = vadd.f32 %v513, %v522
        %s527 = scalar_lea.vmem [#allocation2], 16
        %v528 = vld [vmem:[%s527] sm:$0x7]
        %v529 = vld [vmem:[%s527 + $0x10] sm:$0x7]
        %v530 = vld [vmem:[%s527 + $0x30] sm:$0x7]
        %v531 = vld [vmem:[%s527 + $0x40] sm:$0x7]
        %v532 = vperm.slane %v448, 6
        %v533 = vmul.f32 %v528, %v532
        %v534 = vmul.f32 %v529, %v532
        %v535 = vmul.f32 %v530, %v532
        %v536 = vmul.f32 %v531, %v532
        %v537 = vadd.f32 %v523, %v533
        %v538 = vadd.f32 %v524, %v534
        %v539 = vadd.f32 %v525, %v535
        %v540 = vadd.f32 %v526, %v536
        %v541 = vld [vmem:[%s527 + $0x1] sm:$0x7]
        %v542 = vld [vmem:[%s527 + $0x11] sm:$0x7]
        %v543 = vld [vmem:[%s527 + $0x31] sm:$0x7]
        %v544 = vld [vmem:[%s527 + $0x41] sm:$0x7]
        %v545 = vperm.slane %v448, 7
        %v546 = vmul.f32 %v541, %v545
        %v547 = vmul.f32 %v542, %v545
        %v548 = vmul.f32 %v543, %v545
        %v549 = vmul.f32 %v544, %v545
        %v550 = vadd.f32 %v537, %v546
        %v551 = vadd.f32 %v538, %v547
        %v552 = vadd.f32 %v539, %v548
        %v553 = vadd.f32 %v540, %v549
        %v554 = vld [vmem:[%s527 + $0x2] sm:$0x7]
        %v555 = vld [vmem:[%s527 + $0x12] sm:$0x7]
        %v556 = vld [vmem:[%s527 + $0x32] sm:$0x7]
        %v557 = vld [vmem:[%s527 + $0x42] sm:$0x7]
        %v558 = vperm.slane %v449, 0
        %v559 = vmul.f32 %v554, %v558
        %v560 = vmul.f32 %v555, %v558
        %v561 = vmul.f32 %v556, %v558
        %v562 = vmul.f32 %v557, %v558
        %v563 = vadd.f32 %v550, %v559
        %v564 = vadd.f32 %v551, %v560
        %v565 = vadd.f32 %v552, %v561
        %v566 = vadd.f32 %v553, %v562
        %s567 = scalar_lea.vmem [#allocation2], 48
        %v568 = vld [vmem:[%s567] sm:$0x7]
        %v569 = vld [vmem:[%s567 + $0x10] sm:$0x7]
        %v570 = vld [vmem:[%s567 + $0x30] sm:$0x7]
        %v571 = vld [vmem:[%s567 + $0x40] sm:$0x7]
        %v572 = vperm.slane %v449, 1
        %v573 = vmul.f32 %v568, %v572
        %v574 = vmul.f32 %v569, %v572
        %v575 = vmul.f32 %v570, %v572
        %v576 = vmul.f32 %v571, %v572
        %v577 = vld [vmem:[%s567 + $0x1] sm:$0x7]
        %v578 = vld [vmem:[%s567 + $0x11] sm:$0x7]
        %v579 = vld [vmem:[%s567 + $0x31] sm:$0x7]
        %v580 = vld [vmem:[%s567 + $0x41] sm:$0x7]
        %v581 = vperm.slane %v449, 2
        %v582 = vmul.f32 %v577, %v581
        %v583 = vmul.f32 %v578, %v581
        %v584 = vmul.f32 %v579, %v581
        %v585 = vmul.f32 %v580, %v581
        %v586 = vadd.f32 %v573, %v582
        %v587 = vadd.f32 %v574, %v583
        %v588 = vadd.f32 %v575, %v584
        %v589 = vadd.f32 %v576, %v585
        %v590 = vld [vmem:[%s567 + $0x2] sm:$0x7]
        %v591 = vld [vmem:[%s567 + $0x12] sm:$0x7]
        %v592 = vld [vmem:[%s567 + $0x32] sm:$0x7]
        %v593 = vld [vmem:[%s567 + $0x42] sm:$0x7]
        %v594 = vperm.slane %v449, 3
        %v595 = vmul.f32 %v590, %v594
        %v596 = vmul.f32 %v591, %v594
        %v597 = vmul.f32 %v592, %v594
        %v598 = vmul.f32 %v593, %v594
        %v599 = vadd.f32 %v586, %v595
        %v600 = vadd.f32 %v587, %v596
        %v601 = vadd.f32 %v588, %v597
        %v602 = vadd.f32 %v589, %v598
        %v603 = vld [vmem:[%s409] sm:$0x7]
        %v604 = vld [vmem:[%s409 + $0x10] sm:$0x7]
        %v605 = vld [vmem:[%s409 + $0x30] sm:$0x7]
        %v606 = vld [vmem:[%s409 + $0x40] sm:$0x7]
        %v607 = vperm.slane %v449, 4
        %v608 = vmul.f32 %v603, %v607
        %v609 = vmul.f32 %v604, %v607
        %v610 = vmul.f32 %v605, %v607
        %v611 = vmul.f32 %v606, %v607
        %v612 = vadd.f32 %v599, %v608
        %v613 = vadd.f32 %v600, %v609
        %v614 = vadd.f32 %v601, %v610
        %v615 = vadd.f32 %v602, %v611
        %v616 = vld [vmem:[%s409 + $0x1] sm:$0x7]
        %v617 = vld [vmem:[%s409 + $0x11] sm:$0x7]
        %v618 = vld [vmem:[%s409 + $0x31] sm:$0x7]
        %v619 = vld [vmem:[%s409 + $0x41] sm:$0x7]
        %v620 = vperm.slane %v449, 5
        %v621 = vmul.f32 %v616, %v620
        %v622 = vmul.f32 %v617, %v620
        %v623 = vmul.f32 %v618, %v620
        %v624 = vmul.f32 %v619, %v620
        %v625 = vadd.f32 %v612, %v621
        %v626 = vadd.f32 %v613, %v622
        %v627 = vadd.f32 %v614, %v623
        %v628 = vadd.f32 %v615, %v624
        %v629 = vld [vmem:[%s409 + $0x2] sm:$0x7]
        %v630 = vld [vmem:[%s409 + $0x12] sm:$0x7]
        %v631 = vld [vmem:[%s409 + $0x32] sm:$0x7]
        %v632 = vld [vmem:[%s409 + $0x42] sm:$0x7]
        %v633 = vperm.slane %v449, 6
        %v634 = vmul.f32 %v629, %v633
        %v635 = vmul.f32 %v630, %v633
        %v636 = vmul.f32 %v631, %v633
        %v637 = vmul.f32 %v632, %v633
        %v638 = vadd.f32 %v625, %v634
        %v639 = vadd.f32 %v626, %v635
        %v640 = vadd.f32 %v627, %v636
        %v641 = vadd.f32 %v628, %v637
        %v642 = vld [vmem:[%s416] sm:$0x7]
        %v643 = vld [vmem:[%s416 + $0x10] sm:$0x7]
        %v644 = vld [vmem:[%s416 + $0x30] sm:$0x7]
        %v645 = vld [vmem:[%s416 + $0x40] sm:$0x7]
        %v646 = vperm.slane %v449, 7
        %v647 = vmul.f32 %v642, %v646
        %v648 = vmul.f32 %v643, %v646
        %v649 = vmul.f32 %v644, %v646
        %v650 = vmul.f32 %v645, %v646
        %v651 = vadd.f32 %v638, %v647
        %v652 = vadd.f32 %v639, %v648
        %v653 = vadd.f32 %v640, %v649
        %v654 = vadd.f32 %v641, %v650
        %v655 = vld [vmem:[%s416 + $0x1] sm:$0x7]
        %v656 = vld [vmem:[%s416 + $0x11] sm:$0x7]
        %v657 = vld [vmem:[%s416 + $0x31] sm:$0x7]
        %v658 = vld [vmem:[%s416 + $0x41] sm:$0x7]
        %v659 = vperm.slane %v450, 0
        %v660 = vmul.f32 %v655, %v659
        %v661 = vmul.f32 %v656, %v659
        %v662 = vmul.f32 %v657, %v659
        %v663 = vmul.f32 %v658, %v659
        %v664 = vadd.f32 %v651, %v660
        %v665 = vadd.f32 %v652, %v661
        %v666 = vadd.f32 %v653, %v662
        %v667 = vadd.f32 %v654, %v663
        %v668 = vld [vmem:[%s416 + $0x2] sm:$0x7]
        %v669 = vld [vmem:[%s416 + $0x12] sm:$0x7]
        %v670 = vld [vmem:[%s416 + $0x32] sm:$0x7]
        %v671 = vld [vmem:[%s416 + $0x42] sm:$0x7]
        %v672 = vperm.slane %v450, 1
        %v673 = vmul.f32 %v668, %v672
        %v674 = vmul.f32 %v669, %v672
        %v675 = vmul.f32 %v670, %v672
        %v676 = vmul.f32 %v671, %v672
        %v677 = vadd.f32 %v664, %v673
        %v678 = vadd.f32 %v665, %v674
        %v679 = vadd.f32 %v666, %v675
        %v680 = vadd.f32 %v667, %v676
        %s681 = scalar_lea.vmem [#allocation2], 96
        %v682 = vld [vmem:[%s681] sm:$0x7]
        %v683 = vld [vmem:[%s681 + $0x10] sm:$0x7]
        %v684 = vld [vmem:[%s681 + $0x30] sm:$0x7]
        %v685 = vld [vmem:[%s681 + $0x40] sm:$0x7]
        %v686 = vperm.slane %v450, 2
        %v687 = vmul.f32 %v682, %v686
        %v688 = vmul.f32 %v683, %v686
        %v689 = vmul.f32 %v684, %v686
        %v690 = vmul.f32 %v685, %v686
        %v691 = vld [vmem:[%s681 + $0x1] sm:$0x7]
        %v692 = vld [vmem:[%s681 + $0x11] sm:$0x7]
        %v693 = vld [vmem:[%s681 + $0x31] sm:$0x7]
        %v694 = vld [vmem:[%s681 + $0x41] sm:$0x7]
        %v695 = vperm.slane %v450, 3
        %v696 = vmul.f32 %v691, %v695
        %v697 = vmul.f32 %v692, %v695
        %v698 = vmul.f32 %v693, %v695
        %v699 = vmul.f32 %v694, %v695
        %v700 = vadd.f32 %v687, %v696
        %v701 = vadd.f32 %v688, %v697
        %v702 = vadd.f32 %v689, %v698
        %v703 = vadd.f32 %v690, %v699
        %v704 = vld [vmem:[%s681 + $0x2] sm:$0x7]
        %v705 = vld [vmem:[%s681 + $0x12] sm:$0x7]
        %v706 = vld [vmem:[%s681 + $0x32] sm:$0x7]
        %v707 = vld [vmem:[%s681 + $0x42] sm:$0x7]
        %v708 = vperm.slane %v450, 4
        %v709 = vmul.f32 %v704, %v708
        %v710 = vmul.f32 %v705, %v708
        %v711 = vmul.f32 %v706, %v708
        %v712 = vmul.f32 %v707, %v708
        %v713 = vadd.f32 %v700, %v709
        %v714 = vadd.f32 %v701, %v710
        %v715 = vadd.f32 %v702, %v711
        %v716 = vadd.f32 %v703, %v712
        %v717 = vld [vmem:[%s430] sm:$0x7]
        %v718 = vld [vmem:[%s430 + $0x10] sm:$0x7]
        %v719 = vld [vmem:[%s430 + $0x30] sm:$0x7]
        %v720 = vld [vmem:[%s430 + $0x40] sm:$0x7]
        %v721 = vperm.slane %v450, 5
        %v722 = vmul.f32 %v717, %v721
        %v723 = vmul.f32 %v718, %v721
        %v724 = vmul.f32 %v719, %v721
        %v725 = vmul.f32 %v720, %v721
        %v726 = vadd.f32 %v713, %v722
        %v727 = vadd.f32 %v714, %v723
        %v728 = vadd.f32 %v715, %v724
        %v729 = vadd.f32 %v716, %v725
        %v730 = vld [vmem:[%s430 + $0x1] sm:$0x7]
        %v731 = vld [vmem:[%s430 + $0x11] sm:$0x7]
        %v732 = vld [vmem:[%s430 + $0x31] sm:$0x7]
        %v733 = vld [vmem:[%s430 + $0x41] sm:$0x7]
        %v734 = vperm.slane %v450, 6
        %v735 = vmul.f32 %v730, %v734
        %v736 = vmul.f32 %v731, %v734
        %v737 = vmul.f32 %v732, %v734
        %v738 = vmul.f32 %v733, %v734
        %v739 = vadd.f32 %v726, %v735
        %v740 = vadd.f32 %v727, %v736
        %v741 = vadd.f32 %v728, %v737
        %v742 = vadd.f32 %v729, %v738
        %v743 = vld [vmem:[%s430 + $0x2] sm:$0x7]
        %v744 = vld [vmem:[%s430 + $0x12] sm:$0x7]
        %v745 = vld [vmem:[%s430 + $0x32] sm:$0x7]
        %v746 = vld [vmem:[%s430 + $0x42] sm:$0x7]
        %v747 = vperm.slane %v450, 7
        %v748 = vmul.f32 %v743, %v747
        %v749 = vmul.f32 %v744, %v747
        %v750 = vmul.f32 %v745, %v747
        %v751 = vmul.f32 %v746, %v747
        %v752 = vadd.f32 %v739, %v748
        %v753 = vadd.f32 %v740, %v749
        %v754 = vadd.f32 %v741, %v750
        %v755 = vadd.f32 %v742, %v751
        %v756 = vld [vmem:[%s436] sm:$0x7]
        %v757 = vld [vmem:[%s436 + $0x10] sm:$0x7]
        %v758 = vld [vmem:[%s436 + $0x30] sm:$0x7]
        %v759 = vld [vmem:[%s436 + $0x40] sm:$0x7]
        %v760 = vperm.slane %v451, 0
        %v761 = vmul.f32 %v756, %v760
        %v762 = vmul.f32 %v757, %v760
        %v763 = vmul.f32 %v758, %v760
        %v764 = vmul.f32 %v759, %v760
        %v765 = vadd.f32 %v752, %v761
        %v766 = vadd.f32 %v753, %v762
        %v767 = vadd.f32 %v754, %v763
        %v768 = vadd.f32 %v755, %v764
        %v769 = vld [vmem:[%s436 + $0x1] sm:$0x7]
        %v770 = vld [vmem:[%s436 + $0x11] sm:$0x7]
        %v771 = vld [vmem:[%s436 + $0x31] sm:$0x7]
        %v772 = vld [vmem:[%s436 + $0x41] sm:$0x7]
        %v773 = vperm.slane %v451, 1
        %v774 = vmul.f32 %v769, %v773
        %v775 = vmul.f32 %v770, %v773
        %v776 = vmul.f32 %v771, %v773
        %v777 = vmul.f32 %v772, %v773
        %v778 = vadd.f32 %v765, %v774
        %v779 = vadd.f32 %v766, %v775
        %v780 = vadd.f32 %v767, %v776
        %v781 = vadd.f32 %v768, %v777
        %v782 = vld [vmem:[%s436 + $0x2] sm:$0x7]
        %v783 = vld [vmem:[%s436 + $0x12] sm:$0x7]
        %v784 = vld [vmem:[%s436 + $0x32] sm:$0x7]
        %v785 = vld [vmem:[%s436 + $0x42] sm:$0x7]
        %v786 = vperm.slane %v451, 2
        %v787 = vmul.f32 %v782, %v786
        %v788 = vmul.f32 %v783, %v786
        %v789 = vmul.f32 %v784, %v786
        %v790 = vmul.f32 %v785, %v786
        %v791 = vadd.f32 %v778, %v787
        %v792 = vadd.f32 %v779, %v788
        %v793 = vadd.f32 %v780, %v789
        %v794 = vadd.f32 %v781, %v790
        %v795 = vadd.f32 %v563, %v677
        %v796 = vadd.f32 %v564, %v678
        %v797 = vadd.f32 %v565, %v679
        %v798 = vadd.f32 %v566, %v680
        %v799 = vadd.f32 %v795, %v791
        %v800 = vadd.f32 %v796, %v792
        %v801 = vadd.f32 %v797, %v793
        %v802 = vadd.f32 %v798, %v794
        %v804 = vrot.slane %v799, 7
        %805 = vrot.lane.b32.xlu0 %v804, 32
        %v806 = vpop.permute.xlu0 %805
        %808 = vrot.lane.b32.xlu0 %v799, 32
        %v809 = vpop.permute.xlu0 %808
        %v812 = vrot.slane %v800, 5
        %813 = vrot.lane.b32.xlu0 %v812, 32
        %v814 = vpop.permute.xlu0 %813
        %v816 = vrot.slane %v800, 6
        %817 = vrot.lane.b32.xlu0 %v816, 32
        %v818 = vpop.permute.xlu0 %817
        %v821 = vrot.slane %v801, 3
        %822 = vrot.lane.b32.xlu0 %v821, 32
        %v823 = vpop.permute.xlu0 %822
        %v825 = vrot.slane %v801, 4
        %826 = vrot.lane.b32.xlu0 %v825, 32
        %v827 = vpop.permute.xlu0 %826
        %v830 = vrot.slane %v802, 1
        %831 = vrot.lane.b32.xlu0 %v830, 32
        %v832 = vpop.permute.xlu0 %831
        %v834 = vrot.slane %v802, 2
        %835 = vrot.lane.b32.xlu0 %v834, 32
        %v836 = vpop.permute.xlu0 %835
        %vm838 = vcmask 1040384
        %v839 = vsel %vm838, %v366, %v806
        %vm840 = vcmask 1041408
        %v841 = vsel %vm840, %v839, %v809
        %vm842 = vcmask 1042432
        %v843 = vsel %vm842, %v841, %v814
        %vm844 = vcmask 1043456
        %v845 = vsel %vm844, %v843, %v818
        %vm846 = vcmask 1044480
        %v847 = vsel %vm846, %v845, %v823
        %vm848 = vcmask 1045504
        %v849 = vsel %vm848, %v847, %v827
        %vm850 = vcmask 1046528
        %v851 = vsel %vm850, %v849, %v832
        %v852 = vld [vmem:[%s3] sm:$0xff]
        %v853 = vld [vmem:[%s3 + $0x8] sm:$0xff]
        %v854 = vld [vmem:[%s3 + $0x10] sm:$0xff]
        %v855 = vld [vmem:[%s3 + $0x18] sm:$0xff]
        %v856 = vld [vmem:[%s3 + $0x20] sm:$0xff]
        %v857 = vld [vmem:[%s3 + $0x28] sm:$0xff]
        %v858 = vld [vmem:[%s3 + $0x30] sm:$0xff]
        %v859 = vld [vmem:[%s3 + $0x38] sm:$0xff]
        %861 = vrot.lane.b32.xlu0 %v851, 96
        %v862 = vpop.permute.xlu0 %861
        %863 = vrot.lane.b32.xlu0 %v836, 96
        %v864 = vpop.permute.xlu0 %863
        %vm865 = vcmask 523264
        %v866 = vsel %vm865, %v862, 0
        %v868 = vsel %vm865, %v864, 0
        %870 = vmatpush.msra.mxu0 0.0
        %871 = vmatpush.msra.mxu0 0.0
        %872 = vmatpush.msra.mxu0 0.0
        %873 = vmatpush.msra.mxu0 0.0
        %874 = vmatpush.msra.mxu0 0.0
        %875 = vmatpush.msra.mxu0 0.0
        %876 = vmatpush.msra.mxu0 0.0
        %877 = vmatpush.msra.mxu0 0.0
        %878 = vmatpush.msra.mxu0 %v859
        %879 = vmatpush.msra.mxu0 %v858
        %880 = vmatpush.msra.mxu0 %v857
        %881 = vmatpush.msra.mxu0 %v856
        %882 = vmatpush.msra.mxu0 %v855
        %883 = vmatpush.msra.mxu0 %v854
        %884 = vmatpush.msra.mxu0 %v853
        %885 = vmatpush.msra.mxu0 %v852
        %886 = vmatmul.f32.gmra.mxu0 %v866
        %v887 = vpop.f32.mrf.mxu0
        %v888 = vadd.f32 0.0, %v887
        %889 = vmatmul.f32.gmra.mxu0 %v868
        %v890 = vpop.f32.mrf.mxu0
        %v891 = vadd.f32 0.0, %v890
        %892 = vdwg.mxu0
        %895 = vrot.lane.b32.xlu0 %v888, 32
        %v896 = vpop.permute.xlu0 %895
        %897 = vrot.lane.b32.xlu0 %v891, 32
        %v898 = vpop.permute.xlu0 %897
        %v901 = vsub.f32 %v851, %v896
        %v902 = vsub.f32 %v836, %v898
        %v903 = vmul.f32 %v901, %v901
        %v904 = vmul.f32 %v902, %v902
        %907 = vrot.lane.b32.xlu0 %v903, 96
        %v908 = vpop.permute.xlu0 %907
        %909 = vrot.lane.b32.xlu0 %v904, 96
        %v910 = vpop.permute.xlu0 %909
        %v911 = vsel %vm865, %v908, 0
        %v913 = vsel %vm865, %v910, 0
        %915 = vmatpush.msra.mxu0 0.0
        %916 = vmatpush.msra.mxu0 0.0
        %917 = vmatpush.msra.mxu0 0.0
        %918 = vmatpush.msra.mxu0 0.0
        %919 = vmatpush.msra.mxu0 0.0
        %920 = vmatpush.msra.mxu0 0.0
        %921 = vmatpush.msra.mxu0 0.0
        %922 = vmatpush.msra.mxu0 0.0
        %923 = vmatpush.msra.mxu0 %v859
        %924 = vmatpush.msra.mxu0 %v858
        %925 = vmatpush.msra.mxu0 %v857
        %926 = vmatpush.msra.mxu0 %v856
        %927 = vmatpush.msra.mxu0 %v855
        %928 = vmatpush.msra.mxu0 %v854
        %929 = vmatpush.msra.mxu0 %v853
        %930 = vmatpush.msra.mxu0 %v852
        %931 = vmatmul.f32.gmra.mxu0 %v911
        %v932 = vpop.f32.mrf.mxu0
        %v933 = vadd.f32 1e-05, %v932
        %934 = vmatmul.f32.gmra.mxu0 %v913
        %v935 = vpop.f32.mrf.mxu0
        %v936 = vadd.f32 1e-05, %v935
        %937 = vdwg.mxu0
        %v938 = vrsqrt.pop %v933
        %v939 = vmul.f32 %v938, %v933
        %v940 = vmul.f32 %v939, %v938
        %v941 = vmul.f32 0.5, %v940
        %v942 = vsub.f32 1.5, %v941
        %v943 = vmul.f32 %v938, %v942
        %vm944 = vweird.f32 %v933
        %vm945 = vweird.f32 %v938
        %vm946 = vmor %vm944, %vm945
        %v947 = vsel %vm946, %v938, %v943
        %v948 = vrsqrt.pop %v936
        %v949 = vmul.f32 %v948, %v936
        %v950 = vmul.f32 %v949, %v948
        %v951 = vmul.f32 0.5, %v950
        %v952 = vsub.f32 1.5, %v951
        %v953 = vmul.f32 %v948, %v952
        %vm954 = vweird.f32 %v936
        %vm955 = vweird.f32 %v948
        %vm956 = vmor %vm954, %vm955
        %v957 = vsel %vm956, %v948, %v953
        %960 = vrot.lane.b32.xlu0 %v947, 32
        %v961 = vpop.permute.xlu0 %960
        %962 = vrot.lane.b32.xlu0 %v957, 32
        %v963 = vpop.permute.xlu0 %962
        %v966 = vmul.f32 %v901, %v961
        %v967 = vmul.f32 %v902, %v963
        %v968 = vld [vmem:[%s4] sm:$0x1]
        %v970 = vperm.slane %v968, 0
        %971 = vrot.lane.b32.xlu0 %v970, 32
        %v972 = vpop.permute.xlu0 %971
        %v974 = vmul.f32 %v966, %v972
        %v975 = vmul.f32 %v967, %v972
        %v976 = vld [vmem:[%s5] sm:$0x1]
        %v978 = vperm.slane %v976, 0
        %979 = vrot.lane.b32.xlu0 %v978, 32
        %v980 = vpop.permute.xlu0 %979
        %v982 = vadd.f32 %v974, %v980
        %v983 = vadd.f32 %v975, %v980
        %986 = vrot.lane.b32.xlu0 %v982, 96
        %v987 = vpop.permute.xlu0 %986
        %988 = vrot.lane.b32.xlu0 %v983, 96
        %v989 = vpop.permute.xlu0 %988
        %vm990 = vcmask 64512
        %v991 = vsel %vm990, %v366, 0
        %v993 = vsel %vm990, %v369, 0
        %v995 = vsel %vm990, %v372, 0
        %v997 = vsel %vm990, %v375, 0
        %v999 = vsel %vm990, %v378, 0
        %v1001 = vsel %vm990, %v987, 0
        %v1003 = vsel %vm990, %v989, 0
        %1005 = vmatpush.xpose.msra.mxu0 0.0
        %1006 = vmatpush.xpose.msra.mxu0 0.0
        %1007 = vmatpush.xpose.msra.mxu0 0.0
        %1008 = vmatpush.xpose.msra.mxu0 0.0
        %1009 = vmatpush.xpose.msra.mxu0 0.0
        %1010 = vmatpush.xpose.msra.mxu0 0.0
        %1011 = vmatpush.xpose.msra.mxu0 0.0
        %1012 = vmatpush.xpose.msra.mxu0 0.0
        %1013 = vmatpush.xpose.msra.mxu0 0.0
        %1014 = vmatpush.xpose.msra.mxu0 0.0
        %1015 = vmatpush.xpose.msra.mxu0 0.0
        %1016 = vmatpush.xpose.msra.mxu0 0.0
        %1017 = vmatpush.xpose.msra.mxu0 0.0
        %1018 = vmatpush.xpose.msra.mxu0 0.0
        %1019 = vmatpush.xpose.msra.mxu0 %v1003
        %1020 = vmatpush.xpose.msra.mxu0 %v1001
        %1021 = vmatmul.f32.gmra.mxu0 %v991
        %v1022 = vpop.f32.mrf.mxu0
        %v1023 = vadd.f32 0.0, %v1022
        %1024 = vmatmul.f32.gmra.mxu0 %v993
        %v1025 = vpop.f32.mrf.mxu0
        %v1026 = vadd.f32 0.0, %v1025
        %1027 = vmatmul.f32.gmra.mxu0 %v995
        %v1028 = vpop.f32.mrf.mxu0
        %v1029 = vadd.f32 0.0, %v1028
        %1030 = vmatmul.f32.gmra.mxu0 %v997
        %v1031 = vpop.f32.mrf.mxu0
        %v1032 = vadd.f32 0.0, %v1031
        %1033 = vmatmul.f32.gmra.mxu0 %v999
        %v1034 = vpop.f32.mrf.mxu0
        %v1035 = vadd.f32 0.0, %v1034
        %1036 = vdwg.mxu0
        %vm1037 = vcmask 72704
        %v1038 = vsel %vm1037, %v1023, -inf
        %1039 = vmax.xlane.f32.xlu0 %v1038
        %v1040 = vpop.xlane.xlu0 %1039
        %v1041 = vsel %vm1037, %v1026, -inf
        %1042 = vmax.xlane.f32.xlu0 %v1041
        %v1043 = vpop.xlane.xlu0 %1042
        %v1044 = vsel %vm1037, %v1029, -inf
        %1045 = vmax.xlane.f32.xlu0 %v1044
        %v1046 = vpop.xlane.xlu0 %1045
        %v1047 = vsel %vm1037, %v1032, -inf
        %1048 = vmax.xlane.f32.xlu0 %v1047
        %v1049 = vpop.xlane.xlu0 %1048
        %vm1050 = vcmask 65536
        %v1051 = vsel %vm1050, %v1035, -inf
        %1052 = vmax.xlane.f32.xlu0 %v1051
        %v1053 = vpop.xlane.xlu0 %1052
        %v1054 = vsub.f32 %v1023, %v1040
        %v1055 = vsub.f32 %v1026, %v1043
        %v1056 = vsub.f32 %v1029, %v1046
        %v1057 = vsub.f32 %v1032, %v1049
        %v1058 = vsub.f32 %v1035, %v1053
        %v1059 = vmul.f32 %v1054, 1.442695
        %v1060 = vpow.pop %v1059
        %v1061 = vmul.f32 %v1055, 1.442695
        %v1062 = vpow.pop %v1061
        %v1063 = vmul.f32 %v1056, 1.442695
        %v1064 = vpow.pop %v1063
        %v1065 = vmul.f32 %v1057, 1.442695
        %v1066 = vpow.pop %v1065
        %v1067 = vmul.f32 %v1058, 1.442695
        %v1068 = vpow.pop %v1067
        %v1069 = vsel %vm1037, %v1060, 0.0
        %1070 = vadd.xlane.f32.xlu0 %v1069
        %v1071 = vpop.xlane.xlu0 %1070
        %v1072 = vsel %vm1037, %v1062, 0.0
        %1073 = vadd.xlane.f32.xlu0 %v1072
        %v1074 = vpop.xlane.xlu0 %1073
        %v1075 = vsel %vm1037, %v1064, 0.0
        %1076 = vadd.xlane.f32.xlu0 %v1075
        %v1077 = vpop.xlane.xlu0 %1076
        %v1078 = vsel %vm1037, %v1066, 0.0
        %1079 = vadd.xlane.f32.xlu0 %v1078
        %v1080 = vpop.xlane.xlu0 %1079
        %v1081 = vsel %vm1050, %v1068, 0.0
        %1082 = vadd.xlane.f32.xlu0 %v1081
        %v1083 = vpop.xlane.xlu0 %1082
        %v1084 = vrcp.pop %v1071
        %v1085 = vmul.f32 %v1071, %v1084
        %v1086 = vsub.f32 1.0, %v1085
        %v1087 = vmul.f32 %v1084, %v1086
        %v1088 = vadd.f32 %v1084, %v1087
        %vm1089 = vweird.f32 %v1071
        %vm1090 = vweird.f32 %v1084
        %vm1091 = vmor %vm1089, %vm1090
        %v1092 = vsel %vm1091, %v1084, %v1088
        %v1093 = vand.u32 2147483647, %v1071
        %vm1094 = vcmp.eq.f32.partialorder %v1093, 8.507059e+37
        %v1095 = vand.u32 %v1071, 2147483648
        %v1096 = vor.u32 1.1754944e-38, %v1095
        %v1097 = vsel %vm1094, %v1096, %v1092
        %v1098 = vmul.f32 %v1060, %v1097
        %v1099 = vrcp.pop %v1074
        %v1100 = vmul.f32 %v1074, %v1099
        %v1101 = vsub.f32 1.0, %v1100
        %v1102 = vmul.f32 %v1099, %v1101
        %v1103 = vadd.f32 %v1099, %v1102
        %vm1104 = vweird.f32 %v1074
        %vm1105 = vweird.f32 %v1099
        %vm1106 = vmor %vm1104, %vm1105
        %v1107 = vsel %vm1106, %v1099, %v1103
        %v1108 = vand.u32 2147483647, %v1074
        %vm1109 = vcmp.eq.f32.partialorder %v1108, 8.507059e+37
        %v1110 = vand.u32 %v1074, 2147483648
        %v1111 = vor.u32 1.1754944e-38, %v1110
        %v1112 = vsel %vm1109, %v1111, %v1107
        %v1113 = vmul.f32 %v1062, %v1112
        %v1114 = vrcp.pop %v1077
        %v1115 = vmul.f32 %v1077, %v1114
        %v1116 = vsub.f32 1.0, %v1115
        %v1117 = vmul.f32 %v1114, %v1116
        %v1118 = vadd.f32 %v1114, %v1117
        %vm1119 = vweird.f32 %v1077
        %vm1120 = vweird.f32 %v1114
        %vm1121 = vmor %vm1119, %vm1120
        %v1122 = vsel %vm1121, %v1114, %v1118
        %v1123 = vand.u32 2147483647, %v1077
        %vm1124 = vcmp.eq.f32.partialorder %v1123, 8.507059e+37
        %v1125 = vand.u32 %v1077, 2147483648
        %v1126 = vor.u32 1.1754944e-38, %v1125
        %v1127 = vsel %vm1124, %v1126, %v1122
        %v1128 = vmul.f32 %v1064, %v1127
        %v1129 = vrcp.pop %v1080
        %v1130 = vmul.f32 %v1080, %v1129
        %v1131 = vsub.f32 1.0, %v1130
        %v1132 = vmul.f32 %v1129, %v1131
        %v1133 = vadd.f32 %v1129, %v1132
        %vm1134 = vweird.f32 %v1080
        %vm1135 = vweird.f32 %v1129
        %vm1136 = vmor %vm1134, %vm1135
        %v1137 = vsel %vm1136, %v1129, %v1133
        %v1138 = vand.u32 2147483647, %v1080
        %vm1139 = vcmp.eq.f32.partialorder %v1138, 8.507059e+37
        %v1140 = vand.u32 %v1080, 2147483648
        %v1141 = vor.u32 1.1754944e-38, %v1140
        %v1142 = vsel %vm1139, %v1141, %v1137
        %v1143 = vmul.f32 %v1066, %v1142
        %v1144 = vrcp.pop %v1083
        %v1145 = vmul.f32 %v1083, %v1144
        %v1146 = vsub.f32 1.0, %v1145
        %v1147 = vmul.f32 %v1144, %v1146
        %v1148 = vadd.f32 %v1144, %v1147
        %vm1149 = vweird.f32 %v1083
        %vm1150 = vweird.f32 %v1144
        %vm1151 = vmor %vm1149, %vm1150
        %v1152 = vsel %vm1151, %v1144, %v1148
        %v1153 = vand.u32 2147483647, %v1083
        %vm1154 = vcmp.eq.f32.partialorder %v1153, 8.507059e+37
        %v1155 = vand.u32 %v1083, 2147483648
        %v1156 = vor.u32 1.1754944e-38, %v1155
        %v1157 = vsel %vm1154, %v1156, %v1152
        %v1158 = vmul.f32 %v1068, %v1157
        %1159 = vrot.lane.b32.xlu0 %v982, 64
        %v1160 = vpop.permute.xlu0 %1159
        %1161 = vrot.lane.b32.xlu0 %v983, 64
        %v1162 = vpop.permute.xlu0 %1161
        %v1165 = vsel %vm1037, %v1098, 0
        %v1168 = vsel %vm1037, %v1113, 0
        %v1171 = vsel %vm1037, %v1128, 0
        %v1174 = vsel %vm1037, %v1143, 0
        %v1177 = vsel %vm1037, %v1158, 0
        %v1179 = vsel %vm838, %v1162, 0
        %1181 = vmatpush.msra.mxu0 0.0
        %1182 = vmatpush.msra.mxu0 0.0
        %1183 = vmatpush.msra.mxu0 0.0
        %1184 = vmatpush.msra.mxu0 0.0
        %1185 = vmatpush.msra.mxu0 0.0
        %1186 = vmatpush.msra.mxu0 0.0
        %1187 = vmatpush.msra.mxu0 0.0
        %1188 = vmatpush.msra.mxu0 0.0
        %1189 = vmatpush.msra.mxu0 0.0
        %1190 = vmatpush.msra.mxu0 0.0
        %1191 = vmatpush.msra.mxu0 0.0
        %1192 = vmatpush.msra.mxu0 0.0
        %1193 = vmatpush.msra.mxu0 0.0
        %1194 = vmatpush.msra.mxu0 0.0
        %1195 = vmatpush.msra.mxu0 %v1179
        %1196 = vmatpush.msra.mxu0 %v1160
        %1197 = vmatmul.f32.gmra.mxu0 %v1165
        %v1198 = vpop.f32.mrf.mxu0
        %v1199 = vadd.f32 0.0, %v1198
        %1200 = vmatmul.f32.gmra.mxu0 %v1168
        %v1201 = vpop.f32.mrf.mxu0
        %v1202 = vadd.f32 0.0, %v1201
        %1203 = vmatmul.f32.gmra.mxu0 %v1171
        %v1204 = vpop.f32.mrf.mxu0
        %v1205 = vadd.f32 0.0, %v1204
        %1206 = vmatmul.f32.gmra.mxu0 %v1174
        %v1207 = vpop.f32.mrf.mxu0
        %v1208 = vadd.f32 0.0, %v1207
        %1209 = vmatmul.f32.gmra.mxu0 %v1177
        %v1210 = vpop.f32.mrf.mxu0
        %v1211 = vadd.f32 0.0, %v1210
        %1212 = vdwg.mxu0
        %1213 = vrot.lane.b32.xlu0 %v366, 120
        %v1214 = vpop.permute.xlu0 %1213
        %1215 = vrot.lane.b32.xlu0 %v369, 120
        %v1216 = vpop.permute.xlu0 %1215
        %1217 = vrot.lane.b32.xlu0 %v372, 120
        %v1218 = vpop.permute.xlu0 %1217
        %1219 = vrot.lane.b32.xlu0 %v375, 120
        %v1220 = vpop.permute.xlu0 %1219
        %1221 = vrot.lane.b32.xlu0 %v378, 120
        %v1222 = vpop.permute.xlu0 %1221
        %1223 = vrot.lane.b32.xlu0 %v982, 88
        %v1224 = vpop.permute.xlu0 %1223
        %1225 = vrot.lane.b32.xlu0 %v983, 88
        %v1226 = vpop.permute.xlu0 %1225
        %v1227 = vsel %vm990, %v1214, 0
        %v1229 = vsel %vm990, %v1216, 0
        %v1231 = vsel %vm990, %v1218, 0
        %v1233 = vsel %vm990, %v1220, 0
        %v1235 = vsel %vm990, %v1222, 0
        %v1237 = vsel %vm990, %v1224, 0
        %v1239 = vsel %vm990, %v1226, 0
        %1241 = vmatpush.xpose.msra.mxu0 0.0
        %1242 = vmatpush.xpose.msra.mxu0 0.0
        %1243 = vmatpush.xpose.msra.mxu0 0.0
        %1244 = vmatpush.xpose.msra.mxu0 0.0
        %1245 = vmatpush.xpose.msra.mxu0 0.0
        %1246 = vmatpush.xpose.msra.mxu0 0.0
        %1247 = vmatpush.xpose.msra.mxu0 0.0
        %1248 = vmatpush.xpose.msra.mxu0 0.0
        %1249 = vmatpush.xpose.msra.mxu0 0.0
        %1250 = vmatpush.xpose.msra.mxu0 0.0
        %1251 = vmatpush.xpose.msra.mxu0 0.0
        %1252 = vmatpush.xpose.msra.mxu0 0.0
        %1253 = vmatpush.xpose.msra.mxu0 0.0
        %1254 = vmatpush.xpose.msra.mxu0 0.0
        %1255 = vmatpush.xpose.msra.mxu0 %v1239
        %1256 = vmatpush.xpose.msra.mxu0 %v1237
        %1257 = vmatmul.f32.gmra.mxu0 %v1227
        %v1258 = vpop.f32.mrf.mxu0
        %v1259 = vadd.f32 0.0, %v1258
        %1260 = vmatmul.f32.gmra.mxu0 %v1229
        %v1261 = vpop.f32.mrf.mxu0
        %v1262 = vadd.f32 0.0, %v1261
        %1263 = vmatmul.f32.gmra.mxu0 %v1231
        %v1264 = vpop.f32.mrf.mxu0
        %v1265 = vadd.f32 0.0, %v1264
        %1266 = vmatmul.f32.gmra.mxu0 %v1233
        %v1267 = vpop.f32.mrf.mxu0
        %v1268 = vadd.f32 0.0, %v1267
        %1269 = vmatmul.f32.gmra.mxu0 %v1235
        %v1270 = vpop.f32.mrf.mxu0
        %v1271 = vadd.f32 0.0, %v1270
        %1272 = vdwg.mxu0
        %v1273 = vsel %vm1037, %v1259, -inf
        %1274 = vmax.xlane.f32.xlu0 %v1273
        %v1275 = vpop.xlane.xlu0 %1274
        %v1276 = vsel %vm1037, %v1262, -inf
        %1277 = vmax.xlane.f32.xlu0 %v1276
        %v1278 = vpop.xlane.xlu0 %1277
        %v1279 = vsel %vm1037, %v1265, -inf
        %1280 = vmax.xlane.f32.xlu0 %v1279
        %v1281 = vpop.xlane.xlu0 %1280
        %v1282 = vsel %vm1037, %v1268, -inf
        %1283 = vmax.xlane.f32.xlu0 %v1282
        %v1284 = vpop.xlane.xlu0 %1283
        %v1285 = vsel %vm1050, %v1271, -inf
        %1286 = vmax.xlane.f32.xlu0 %v1285
        %v1287 = vpop.xlane.xlu0 %1286
        %v1288 = vsub.f32 %v1259, %v1275
        %v1289 = vsub.f32 %v1262, %v1278
        %v1290 = vsub.f32 %v1265, %v1281
        %v1291 = vsub.f32 %v1268, %v1284
        %v1292 = vsub.f32 %v1271, %v1287
        %v1293 = vmul.f32 %v1288, 1.442695
        %v1294 = vpow.pop %v1293
        %v1295 = vmul.f32 %v1289, 1.442695
        %v1296 = vpow.pop %v1295
        %v1297 = vmul.f32 %v1290, 1.442695
        %v1298 = vpow.pop %v1297
        %v1299 = vmul.f32 %v1291, 1.442695
        %v1300 = vpow.pop %v1299
        %v1301 = vmul.f32 %v1292, 1.442695
        %v1302 = vpow.pop %v1301
        %v1303 = vsel %vm1037, %v1294, 0.0
        %1304 = vadd.xlane.f32.xlu0 %v1303
        %v1305 = vpop.xlane.xlu0 %1304
        %v1306 = vsel %vm1037, %v1296, 0.0
        %1307 = vadd.xlane.f32.xlu0 %v1306
        %v1308 = vpop.xlane.xlu0 %1307
        %v1309 = vsel %vm1037, %v1298, 0.0
        %1310 = vadd.xlane.f32.xlu0 %v1309
        %v1311 = vpop.xlane.xlu0 %1310
        %v1312 = vsel %vm1037, %v1300, 0.0
        %1313 = vadd.xlane.f32.xlu0 %v1312
        %v1314 = vpop.xlane.xlu0 %1313
        %v1315 = vsel %vm1050, %v1302, 0.0
        %1316 = vadd.xlane.f32.xlu0 %v1315
        %v1317 = vpop.xlane.xlu0 %1316
        %v1318 = vrcp.pop %v1305
        %v1319 = vmul.f32 %v1305, %v1318
        %v1320 = vsub.f32 1.0, %v1319
        %v1321 = vmul.f32 %v1318, %v1320
        %v1322 = vadd.f32 %v1318, %v1321
        %vm1323 = vweird.f32 %v1305
        %vm1324 = vweird.f32 %v1318
        %vm1325 = vmor %vm1323, %vm1324
        %v1326 = vsel %vm1325, %v1318, %v1322
        %v1327 = vand.u32 2147483647, %v1305
        %vm1328 = vcmp.eq.f32.partialorder %v1327, 8.507059e+37
        %v1329 = vand.u32 %v1305, 2147483648
        %v1330 = vor.u32 1.1754944e-38, %v1329
        %v1331 = vsel %vm1328, %v1330, %v1326
        %v1332 = vmul.f32 %v1294, %v1331
        %v1333 = vrcp.pop %v1308
        %v1334 = vmul.f32 %v1308, %v1333
        %v1335 = vsub.f32 1.0, %v1334
        %v1336 = vmul.f32 %v1333, %v1335
        %v1337 = vadd.f32 %v1333, %v1336
        %vm1338 = vweird.f32 %v1308
        %vm1339 = vweird.f32 %v1333
        %vm1340 = vmor %vm1338, %vm1339
        %v1341 = vsel %vm1340, %v1333, %v1337
        %v1342 = vand.u32 2147483647, %v1308
        %vm1343 = vcmp.eq.f32.partialorder %v1342, 8.507059e+37
        %v1344 = vand.u32 %v1308, 2147483648
        %v1345 = vor.u32 1.1754944e-38, %v1344
        %v1346 = vsel %vm1343, %v1345, %v1341
        %v1347 = vmul.f32 %v1296, %v1346
        %v1348 = vrcp.pop %v1311
        %v1349 = vmul.f32 %v1311, %v1348
        %v1350 = vsub.f32 1.0, %v1349
        %v1351 = vmul.f32 %v1348, %v1350
        %v1352 = vadd.f32 %v1348, %v1351
        %vm1353 = vweird.f32 %v1311
        %vm1354 = vweird.f32 %v1348
        %vm1355 = vmor %vm1353, %vm1354
        %v1356 = vsel %vm1355, %v1348, %v1352
        %v1357 = vand.u32 2147483647, %v1311
        %vm1358 = vcmp.eq.f32.partialorder %v1357, 8.507059e+37
        %v1359 = vand.u32 %v1311, 2147483648
        %v1360 = vor.u32 1.1754944e-38, %v1359
        %v1361 = vsel %vm1358, %v1360, %v1356
        %v1362 = vmul.f32 %v1298, %v1361
        %v1363 = vrcp.pop %v1314
        %v1364 = vmul.f32 %v1314, %v1363
        %v1365 = vsub.f32 1.0, %v1364
        %v1366 = vmul.f32 %v1363, %v1365
        %v1367 = vadd.f32 %v1363, %v1366
        %vm1368 = vweird.f32 %v1314
        %vm1369 = vweird.f32 %v1363
        %vm1370 = vmor %vm1368, %vm1369
        %v1371 = vsel %vm1370, %v1363, %v1367
        %v1372 = vand.u32 2147483647, %v1314
        %vm1373 = vcmp.eq.f32.partialorder %v1372, 8.507059e+37
        %v1374 = vand.u32 %v1314, 2147483648
        %v1375 = vor.u32 1.1754944e-38, %v1374
        %v1376 = vsel %vm1373, %v1375, %v1371
        %v1377 = vmul.f32 %v1300, %v1376
        %v1378 = vrcp.pop %v1317
        %v1379 = vmul.f32 %v1317, %v1378
        %v1380 = vsub.f32 1.0, %v1379
        %v1381 = vmul.f32 %v1378, %v1380
        %v1382 = vadd.f32 %v1378, %v1381
        %vm1383 = vweird.f32 %v1317
        %vm1384 = vweird.f32 %v1378
        %vm1385 = vmor %vm1383, %vm1384
        %v1386 = vsel %vm1385, %v1378, %v1382
        %v1387 = vand.u32 2147483647, %v1317
        %vm1388 = vcmp.eq.f32.partialorder %v1387, 8.507059e+37
        %v1389 = vand.u32 %v1317, 2147483648
        %v1390 = vor.u32 1.1754944e-38, %v1389
        %v1391 = vsel %vm1388, %v1390, %v1386
        %v1392 = vmul.f32 %v1302, %v1391
        %1393 = vrot.lane.b32.xlu0 %v982, 56
        %v1394 = vpop.permute.xlu0 %1393
        %1395 = vrot.lane.b32.xlu0 %v983, 56
        %v1396 = vpop.permute.xlu0 %1395
        %v1399 = vsel %vm1037, %v1332, 0
        %v1402 = vsel %vm1037, %v1347, 0
        %v1405 = vsel %vm1037, %v1362, 0
        %v1408 = vsel %vm1037, %v1377, 0
        %v1411 = vsel %vm1037, %v1392, 0
        %v1413 = vsel %vm838, %v1396, 0
        %1415 = vmatpush.msra.mxu0 0.0
        %1416 = vmatpush.msra.mxu0 0.0
        %1417 = vmatpush.msra.mxu0 0.0
        %1418 = vmatpush.msra.mxu0 0.0
        %1419 = vmatpush.msra.mxu0 0.0
        %1420 = vmatpush.msra.mxu0 0.0
        %1421 = vmatpush.msra.mxu0 0.0
        %1422 = vmatpush.msra.mxu0 0.0
        %1423 = vmatpush.msra.mxu0 0.0
        %1424 = vmatpush.msra.mxu0 0.0
        %1425 = vmatpush.msra.mxu0 0.0
        %1426 = vmatpush.msra.mxu0 0.0
        %1427 = vmatpush.msra.mxu0 0.0
        %1428 = vmatpush.msra.mxu0 0.0
        %1429 = vmatpush.msra.mxu0 %v1413
        %1430 = vmatpush.msra.mxu0 %v1394
        %1431 = vmatmul.f32.gmra.mxu0 %v1399
        %v1432 = vpop.f32.mrf.mxu0
        %v1433 = vadd.f32 0.0, %v1432
        %1434 = vmatmul.f32.gmra.mxu0 %v1402
        %v1435 = vpop.f32.mrf.mxu0
        %v1436 = vadd.f32 0.0, %v1435
        %1437 = vmatmul.f32.gmra.mxu0 %v1405
        %v1438 = vpop.f32.mrf.mxu0
        %v1439 = vadd.f32 0.0, %v1438
        %1440 = vmatmul.f32.gmra.mxu0 %v1408
        %v1441 = vpop.f32.mrf.mxu0
        %v1442 = vadd.f32 0.0, %v1441
        %1443 = vmatmul.f32.gmra.mxu0 %v1411
        %v1444 = vpop.f32.mrf.mxu0
        %v1445 = vadd.f32 0.0, %v1444
        %1446 = vdwg.mxu0
        %1447 = vrot.lane.b32.xlu0 %v366, 112
        %v1448 = vpop.permute.xlu0 %1447
        %1449 = vrot.lane.b32.xlu0 %v369, 112
        %v1450 = vpop.permute.xlu0 %1449
        %1451 = vrot.lane.b32.xlu0 %v372, 112
        %v1452 = vpop.permute.xlu0 %1451
        %1453 = vrot.lane.b32.xlu0 %v375, 112
        %v1454 = vpop.permute.xlu0 %1453
        %1455 = vrot.lane.b32.xlu0 %v378, 112
        %v1456 = vpop.permute.xlu0 %1455
        %1457 = vrot.lane.b32.xlu0 %v982, 80
        %v1458 = vpop.permute.xlu0 %1457
        %1459 = vrot.lane.b32.xlu0 %v983, 80
        %v1460 = vpop.permute.xlu0 %1459
        %v1461 = vsel %vm990, %v1448, 0
        %v1463 = vsel %vm990, %v1450, 0
        %v1465 = vsel %vm990, %v1452, 0
        %v1467 = vsel %vm990, %v1454, 0
        %v1469 = vsel %vm990, %v1456, 0
        %v1471 = vsel %vm990, %v1458, 0
        %v1473 = vsel %vm990, %v1460, 0
        %1475 = vmatpush.xpose.msra.mxu0 0.0
        %1476 = vmatpush.xpose.msra.mxu0 0.0
        %1477 = vmatpush.xpose.msra.mxu0 0.0
        %1478 = vmatpush.xpose.msra.mxu0 0.0
        %1479 = vmatpush.xpose.msra.mxu0 0.0
        %1480 = vmatpush.xpose.msra.mxu0 0.0
        %1481 = vmatpush.xpose.msra.mxu0 0.0
        %1482 = vmatpush.xpose.msra.mxu0 0.0
        %1483 = vmatpush.xpose.msra.mxu0 0.0
        %1484 = vmatpush.xpose.msra.mxu0 0.0
        %1485 = vmatpush.xpose.msra.mxu0 0.0
        %1486 = vmatpush.xpose.msra.mxu0 0.0
        %1487 = vmatpush.xpose.msra.mxu0 0.0
        %1488 = vmatpush.xpose.msra.mxu0 0.0
        %1489 = vmatpush.xpose.msra.mxu0 %v1473
        %1490 = vmatpush.xpose.msra.mxu0 %v1471
        %1491 = vmatmul.f32.gmra.mxu0 %v1461
        %v1492 = vpop.f32.mrf.mxu0
        %v1493 = vadd.f32 0.0, %v1492
        %1494 = vmatmul.f32.gmra.mxu0 %v1463
        %v1495 = vpop.f32.mrf.mxu0
        %v1496 = vadd.f32 0.0, %v1495
        %1497 = vmatmul.f32.gmra.mxu0 %v1465
        %v1498 = vpop.f32.mrf.mxu0
        %v1499 = vadd.f32 0.0, %v1498
        %1500 = vmatmul.f32.gmra.mxu0 %v1467
        %v1501 = vpop.f32.mrf.mxu0
        %v1502 = vadd.f32 0.0, %v1501
        %1503 = vmatmul.f32.gmra.mxu0 %v1469
        %v1504 = vpop.f32.mrf.mxu0
        %v1505 = vadd.f32 0.0, %v1504
        %1506 = vdwg.mxu0
        %v1507 = vsel %vm1037, %v1493, -inf
        %1508 = vmax.xlane.f32.xlu0 %v1507
        %v1509 = vpop.xlane.xlu0 %1508
        %v1510 = vsel %vm1037, %v1496, -inf
        %1511 = vmax.xlane.f32.xlu0 %v1510
        %v1512 = vpop.xlane.xlu0 %1511
        %v1513 = vsel %vm1037, %v1499, -inf
        %1514 = vmax.xlane.f32.xlu0 %v1513
        %v1515 = vpop.xlane.xlu0 %1514
        %v1516 = vsel %vm1037, %v1502, -inf
        %1517 = vmax.xlane.f32.xlu0 %v1516
        %v1518 = vpop.xlane.xlu0 %1517
        %v1519 = vsel %vm1050, %v1505, -inf
        %1520 = vmax.xlane.f32.xlu0 %v1519
        %v1521 = vpop.xlane.xlu0 %1520
        %v1522 = vsub.f32 %v1493, %v1509
        %v1523 = vsub.f32 %v1496, %v1512
        %v1524 = vsub.f32 %v1499, %v1515
        %v1525 = vsub.f32 %v1502, %v1518
        %v1526 = vsub.f32 %v1505, %v1521
        %v1527 = vmul.f32 %v1522, 1.442695
        %v1528 = vpow.pop %v1527
        %v1529 = vmul.f32 %v1523, 1.442695
        %v1530 = vpow.pop %v1529
        %v1531 = vmul.f32 %v1524, 1.442695
        %v1532 = vpow.pop %v1531
        %v1533 = vmul.f32 %v1525, 1.442695
        %v1534 = vpow.pop %v1533
        %v1535 = vmul.f32 %v1526, 1.442695
        %v1536 = vpow.pop %v1535
        %v1537 = vsel %vm1037, %v1528, 0.0
        %1538 = vadd.xlane.f32.xlu0 %v1537
        %v1539 = vpop.xlane.xlu0 %1538
        %v1540 = vsel %vm1037, %v1530, 0.0
        %1541 = vadd.xlane.f32.xlu0 %v1540
        %v1542 = vpop.xlane.xlu0 %1541
        %v1543 = vsel %vm1037, %v1532, 0.0
        %1544 = vadd.xlane.f32.xlu0 %v1543
        %v1545 = vpop.xlane.xlu0 %1544
        %v1546 = vsel %vm1037, %v1534, 0.0
        %1547 = vadd.xlane.f32.xlu0 %v1546
        %v1548 = vpop.xlane.xlu0 %1547
        %v1549 = vsel %vm1050, %v1536, 0.0
        %1550 = vadd.xlane.f32.xlu0 %v1549
        %v1551 = vpop.xlane.xlu0 %1550
        %v1552 = vrcp.pop %v1539
        %v1553 = vmul.f32 %v1539, %v1552
        %v1554 = vsub.f32 1.0, %v1553
        %v1555 = vmul.f32 %v1552, %v1554
        %v1556 = vadd.f32 %v1552, %v1555
        %vm1557 = vweird.f32 %v1539
        %vm1558 = vweird.f32 %v1552
        %vm1559 = vmor %vm1557, %vm1558
        %v1560 = vsel %vm1559, %v1552, %v1556
        %v1561 = vand.u32 2147483647, %v1539
        %vm1562 = vcmp.eq.f32.partialorder %v1561, 8.507059e+37
        %v1563 = vand.u32 %v1539, 2147483648
        %v1564 = vor.u32 1.1754944e-38, %v1563
        %v1565 = vsel %vm1562, %v1564, %v1560
        %v1566 = vmul.f32 %v1528, %v1565
        %v1567 = vrcp.pop %v1542
        %v1568 = vmul.f32 %v1542, %v1567
        %v1569 = vsub.f32 1.0, %v1568
        %v1570 = vmul.f32 %v1567, %v1569
        %v1571 = vadd.f32 %v1567, %v1570
        %vm1572 = vweird.f32 %v1542
        %vm1573 = vweird.f32 %v1567
        %vm1574 = vmor %vm1572, %vm1573
        %v1575 = vsel %vm1574, %v1567, %v1571
        %v1576 = vand.u32 2147483647, %v1542
        %vm1577 = vcmp.eq.f32.partialorder %v1576, 8.507059e+37
        %v1578 = vand.u32 %v1542, 2147483648
        %v1579 = vor.u32 1.1754944e-38, %v1578
        %v1580 = vsel %vm1577, %v1579, %v1575
        %v1581 = vmul.f32 %v1530, %v1580
        %v1582 = vrcp.pop %v1545
        %v1583 = vmul.f32 %v1545, %v1582
        %v1584 = vsub.f32 1.0, %v1583
        %v1585 = vmul.f32 %v1582, %v1584
        %v1586 = vadd.f32 %v1582, %v1585
        %vm1587 = vweird.f32 %v1545
        %vm1588 = vweird.f32 %v1582
        %vm1589 = vmor %vm1587, %vm1588
        %v1590 = vsel %vm1589, %v1582, %v1586
        %v1591 = vand.u32 2147483647, %v1545
        %vm1592 = vcmp.eq.f32.partialorder %v1591, 8.507059e+37
        %v1593 = vand.u32 %v1545, 2147483648
        %v1594 = vor.u32 1.1754944e-38, %v1593
        %v1595 = vsel %vm1592, %v1594, %v1590
        %v1596 = vmul.f32 %v1532, %v1595
        %v1597 = vrcp.pop %v1548
        %v1598 = vmul.f32 %v1548, %v1597
        %v1599 = vsub.f32 1.0, %v1598
        %v1600 = vmul.f32 %v1597, %v1599
        %v1601 = vadd.f32 %v1597, %v1600
        %vm1602 = vweird.f32 %v1548
        %vm1603 = vweird.f32 %v1597
        %vm1604 = vmor %vm1602, %vm1603
        %v1605 = vsel %vm1604, %v1597, %v1601
        %v1606 = vand.u32 2147483647, %v1548
        %vm1607 = vcmp.eq.f32.partialorder %v1606, 8.507059e+37
        %v1608 = vand.u32 %v1548, 2147483648
        %v1609 = vor.u32 1.1754944e-38, %v1608
        %v1610 = vsel %vm1607, %v1609, %v1605
        %v1611 = vmul.f32 %v1534, %v1610
        %v1612 = vrcp.pop %v1551
        %v1613 = vmul.f32 %v1551, %v1612
        %v1614 = vsub.f32 1.0, %v1613
        %v1615 = vmul.f32 %v1612, %v1614
        %v1616 = vadd.f32 %v1612, %v1615
        %vm1617 = vweird.f32 %v1551
        %vm1618 = vweird.f32 %v1612
        %vm1619 = vmor %vm1617, %vm1618
        %v1620 = vsel %vm1619, %v1612, %v1616
        %v1621 = vand.u32 2147483647, %v1551
        %vm1622 = vcmp.eq.f32.partialorder %v1621, 8.507059e+37
        %v1623 = vand.u32 %v1551, 2147483648
        %v1624 = vor.u32 1.1754944e-38, %v1623
        %v1625 = vsel %vm1622, %v1624, %v1620
        %v1626 = vmul.f32 %v1536, %v1625
        %1627 = vrot.lane.b32.xlu0 %v982, 48
        %v1628 = vpop.permute.xlu0 %1627
        %1629 = vrot.lane.b32.xlu0 %v983, 48
        %v1630 = vpop.permute.xlu0 %1629
        %v1633 = vsel %vm1037, %v1566, 0
        %v1636 = vsel %vm1037, %v1581, 0
        %v1639 = vsel %vm1037, %v1596, 0
        %v1642 = vsel %vm1037, %v1611, 0
        %v1645 = vsel %vm1037, %v1626, 0
        %v1647 = vsel %vm838, %v1630, 0
        %1649 = vmatpush.msra.mxu0 0.0
        %1650 = vmatpush.msra.mxu0 0.0
        %1651 = vmatpush.msra.mxu0 0.0
        %1652 = vmatpush.msra.mxu0 0.0
        %1653 = vmatpush.msra.mxu0 0.0
        %1654 = vmatpush.msra.mxu0 0.0
        %1655 = vmatpush.msra.mxu0 0.0
        %1656 = vmatpush.msra.mxu0 0.0
        %1657 = vmatpush.msra.mxu0 0.0
        %1658 = vmatpush.msra.mxu0 0.0
        %1659 = vmatpush.msra.mxu0 0.0
        %1660 = vmatpush.msra.mxu0 0.0
        %1661 = vmatpush.msra.mxu0 0.0
        %1662 = vmatpush.msra.mxu0 0.0
        %1663 = vmatpush.msra.mxu0 %v1647
        %1664 = vmatpush.msra.mxu0 %v1628
        %1665 = vmatmul.f32.gmra.mxu0 %v1633
        %v1666 = vpop.f32.mrf.mxu0
        %v1667 = vadd.f32 0.0, %v1666
        %1668 = vmatmul.f32.gmra.mxu0 %v1636
        %v1669 = vpop.f32.mrf.mxu0
        %v1670 = vadd.f32 0.0, %v1669
        %1671 = vmatmul.f32.gmra.mxu0 %v1639
        %v1672 = vpop.f32.mrf.mxu0
        %v1673 = vadd.f32 0.0, %v1672
        %1674 = vmatmul.f32.gmra.mxu0 %v1642
        %v1675 = vpop.f32.mrf.mxu0
        %v1676 = vadd.f32 0.0, %v1675
        %1677 = vmatmul.f32.gmra.mxu0 %v1645
        %v1678 = vpop.f32.mrf.mxu0
        %v1679 = vadd.f32 0.0, %v1678
        %1680 = vdwg.mxu0
        %1681 = vrot.lane.b32.xlu0 %v366, 104
        %v1682 = vpop.permute.xlu0 %1681
        %1683 = vrot.lane.b32.xlu0 %v369, 104
        %v1684 = vpop.permute.xlu0 %1683
        %1685 = vrot.lane.b32.xlu0 %v372, 104
        %v1686 = vpop.permute.xlu0 %1685
        %1687 = vrot.lane.b32.xlu0 %v375, 104
        %v1688 = vpop.permute.xlu0 %1687
        %1689 = vrot.lane.b32.xlu0 %v378, 104
        %v1690 = vpop.permute.xlu0 %1689
        %1691 = vrot.lane.b32.xlu0 %v982, 72
        %v1692 = vpop.permute.xlu0 %1691
        %1693 = vrot.lane.b32.xlu0 %v983, 72
        %v1694 = vpop.permute.xlu0 %1693
        %v1695 = vsel %vm990, %v1682, 0
        %v1697 = vsel %vm990, %v1684, 0
        %v1699 = vsel %vm990, %v1686, 0
        %v1701 = vsel %vm990, %v1688, 0
        %v1703 = vsel %vm990, %v1690, 0
        %v1705 = vsel %vm990, %v1692, 0
        %v1707 = vsel %vm990, %v1694, 0
        %1709 = vmatpush.xpose.msra.mxu0 0.0
        %1710 = vmatpush.xpose.msra.mxu0 0.0
        %1711 = vmatpush.xpose.msra.mxu0 0.0
        %1712 = vmatpush.xpose.msra.mxu0 0.0
        %1713 = vmatpush.xpose.msra.mxu0 0.0
        %1714 = vmatpush.xpose.msra.mxu0 0.0
        %1715 = vmatpush.xpose.msra.mxu0 0.0
        %1716 = vmatpush.xpose.msra.mxu0 0.0
        %1717 = vmatpush.xpose.msra.mxu0 0.0
        %1718 = vmatpush.xpose.msra.mxu0 0.0
        %1719 = vmatpush.xpose.msra.mxu0 0.0
        %1720 = vmatpush.xpose.msra.mxu0 0.0
        %1721 = vmatpush.xpose.msra.mxu0 0.0
        %1722 = vmatpush.xpose.msra.mxu0 0.0
        %1723 = vmatpush.xpose.msra.mxu0 %v1707
        %1724 = vmatpush.xpose.msra.mxu0 %v1705
        %1725 = vmatmul.f32.gmra.mxu0 %v1695
        %v1726 = vpop.f32.mrf.mxu0
        %v1727 = vadd.f32 0.0, %v1726
        %1728 = vmatmul.f32.gmra.mxu0 %v1697
        %v1729 = vpop.f32.mrf.mxu0
        %v1730 = vadd.f32 0.0, %v1729
        %1731 = vmatmul.f32.gmra.mxu0 %v1699
        %v1732 = vpop.f32.mrf.mxu0
        %v1733 = vadd.f32 0.0, %v1732
        %1734 = vmatmul.f32.gmra.mxu0 %v1701
        %v1735 = vpop.f32.mrf.mxu0
        %v1736 = vadd.f32 0.0, %v1735
        %1737 = vmatmul.f32.gmra.mxu0 %v1703
        %v1738 = vpop.f32.mrf.mxu0
        %v1739 = vadd.f32 0.0, %v1738
        %1740 = vdwg.mxu0
        %v1741 = vsel %vm1037, %v1727, -inf
        %1742 = vmax.xlane.f32.xlu0 %v1741
        %v1743 = vpop.xlane.xlu0 %1742
        %v1744 = vsel %vm1037, %v1730, -inf
        %1745 = vmax.xlane.f32.xlu0 %v1744
        %v1746 = vpop.xlane.xlu0 %1745
        %v1747 = vsel %vm1037, %v1733, -inf
        %1748 = vmax.xlane.f32.xlu0 %v1747
        %v1749 = vpop.xlane.xlu0 %1748
        %v1750 = vsel %vm1037, %v1736, -inf
        %1751 = vmax.xlane.f32.xlu0 %v1750
        %v1752 = vpop.xlane.xlu0 %1751
        %v1753 = vsel %vm1050, %v1739, -inf
        %1754 = vmax.xlane.f32.xlu0 %v1753
        %v1755 = vpop.xlane.xlu0 %1754
        %v1756 = vsub.f32 %v1727, %v1743
        %v1757 = vsub.f32 %v1730, %v1746
        %v1758 = vsub.f32 %v1733, %v1749
        %v1759 = vsub.f32 %v1736, %v1752
        %v1760 = vsub.f32 %v1739, %v1755
        %v1761 = vmul.f32 %v1756, 1.442695
        %v1762 = vpow.pop %v1761
        %v1763 = vmul.f32 %v1757, 1.442695
        %v1764 = vpow.pop %v1763
        %v1765 = vmul.f32 %v1758, 1.442695
        %v1766 = vpow.pop %v1765
        %v1767 = vmul.f32 %v1759, 1.442695
        %v1768 = vpow.pop %v1767
        %v1769 = vmul.f32 %v1760, 1.442695
        %v1770 = vpow.pop %v1769
        %v1771 = vsel %vm1037, %v1762, 0.0
        %1772 = vadd.xlane.f32.xlu0 %v1771
        %v1773 = vpop.xlane.xlu0 %1772
        %v1774 = vsel %vm1037, %v1764, 0.0
        %1775 = vadd.xlane.f32.xlu0 %v1774
        %v1776 = vpop.xlane.xlu0 %1775
        %v1777 = vsel %vm1037, %v1766, 0.0
        %1778 = vadd.xlane.f32.xlu0 %v1777
        %v1779 = vpop.xlane.xlu0 %1778
        %v1780 = vsel %vm1037, %v1768, 0.0
        %1781 = vadd.xlane.f32.xlu0 %v1780
        %v1782 = vpop.xlane.xlu0 %1781
        %v1783 = vsel %vm1050, %v1770, 0.0
        %1784 = vadd.xlane.f32.xlu0 %v1783
        %v1785 = vpop.xlane.xlu0 %1784
        %v1786 = vrcp.pop %v1773
        %v1787 = vmul.f32 %v1773, %v1786
        %v1788 = vsub.f32 1.0, %v1787
        %v1789 = vmul.f32 %v1786, %v1788
        %v1790 = vadd.f32 %v1786, %v1789
        %vm1791 = vweird.f32 %v1773
        %vm1792 = vweird.f32 %v1786
        %vm1793 = vmor %vm1791, %vm1792
        %v1794 = vsel %vm1793, %v1786, %v1790
        %v1795 = vand.u32 2147483647, %v1773
        %vm1796 = vcmp.eq.f32.partialorder %v1795, 8.507059e+37
        %v1797 = vand.u32 %v1773, 2147483648
        %v1798 = vor.u32 1.1754944e-38, %v1797
        %v1799 = vsel %vm1796, %v1798, %v1794
        %v1800 = vmul.f32 %v1762, %v1799
        %v1801 = vrcp.pop %v1776
        %v1802 = vmul.f32 %v1776, %v1801
        %v1803 = vsub.f32 1.0, %v1802
        %v1804 = vmul.f32 %v1801, %v1803
        %v1805 = vadd.f32 %v1801, %v1804
        %vm1806 = vweird.f32 %v1776
        %vm1807 = vweird.f32 %v1801
        %vm1808 = vmor %vm1806, %vm1807
        %v1809 = vsel %vm1808, %v1801, %v1805
        %v1810 = vand.u32 2147483647, %v1776
        %vm1811 = vcmp.eq.f32.partialorder %v1810, 8.507059e+37
        %v1812 = vand.u32 %v1776, 2147483648
        %v1813 = vor.u32 1.1754944e-38, %v1812
        %v1814 = vsel %vm1811, %v1813, %v1809
        %v1815 = vmul.f32 %v1764, %v1814
        %v1816 = vrcp.pop %v1779
        %v1817 = vmul.f32 %v1779, %v1816
        %v1818 = vsub.f32 1.0, %v1817
        %v1819 = vmul.f32 %v1816, %v1818
        %v1820 = vadd.f32 %v1816, %v1819
        %vm1821 = vweird.f32 %v1779
        %vm1822 = vweird.f32 %v1816
        %vm1823 = vmor %vm1821, %vm1822
        %v1824 = vsel %vm1823, %v1816, %v1820
        %v1825 = vand.u32 2147483647, %v1779
        %vm1826 = vcmp.eq.f32.partialorder %v1825, 8.507059e+37
        %v1827 = vand.u32 %v1779, 2147483648
        %v1828 = vor.u32 1.1754944e-38, %v1827
        %v1829 = vsel %vm1826, %v1828, %v1824
        %v1830 = vmul.f32 %v1766, %v1829
        %v1831 = vrcp.pop %v1782
        %v1832 = vmul.f32 %v1782, %v1831
        %v1833 = vsub.f32 1.0, %v1832
        %v1834 = vmul.f32 %v1831, %v1833
        %v1835 = vadd.f32 %v1831, %v1834
        %vm1836 = vweird.f32 %v1782
        %vm1837 = vweird.f32 %v1831
        %vm1838 = vmor %vm1836, %vm1837
        %v1839 = vsel %vm1838, %v1831, %v1835
        %v1840 = vand.u32 2147483647, %v1782
        %vm1841 = vcmp.eq.f32.partialorder %v1840, 8.507059e+37
        %v1842 = vand.u32 %v1782, 2147483648
        %v1843 = vor.u32 1.1754944e-38, %v1842
        %v1844 = vsel %vm1841, %v1843, %v1839
        %v1845 = vmul.f32 %v1768, %v1844
        %v1846 = vrcp.pop %v1785
        %v1847 = vmul.f32 %v1785, %v1846
        %v1848 = vsub.f32 1.0, %v1847
        %v1849 = vmul.f32 %v1846, %v1848
        %v1850 = vadd.f32 %v1846, %v1849
        %vm1851 = vweird.f32 %v1785
        %vm1852 = vweird.f32 %v1846
        %vm1853 = vmor %vm1851, %vm1852
        %v1854 = vsel %vm1853, %v1846, %v1850
        %v1855 = vand.u32 2147483647, %v1785
        %vm1856 = vcmp.eq.f32.partialorder %v1855, 8.507059e+37
        %v1857 = vand.u32 %v1785, 2147483648
        %v1858 = vor.u32 1.1754944e-38, %v1857
        %v1859 = vsel %vm1856, %v1858, %v1854
        %v1860 = vmul.f32 %v1770, %v1859
        %1861 = vrot.lane.b32.xlu0 %v982, 40
        %v1862 = vpop.permute.xlu0 %1861
        %1863 = vrot.lane.b32.xlu0 %v983, 40
        %v1864 = vpop.permute.xlu0 %1863
        %v1867 = vsel %vm1037, %v1800, 0
        %v1870 = vsel %vm1037, %v1815, 0
        %v1873 = vsel %vm1037, %v1830, 0
        %v1876 = vsel %vm1037, %v1845, 0
        %v1879 = vsel %vm1037, %v1860, 0
        %v1881 = vsel %vm838, %v1864, 0
        %1883 = vmatpush.msra.mxu0 0.0
        %1884 = vmatpush.msra.mxu0 0.0
        %1885 = vmatpush.msra.mxu0 0.0
        %1886 = vmatpush.msra.mxu0 0.0
        %1887 = vmatpush.msra.mxu0 0.0
        %1888 = vmatpush.msra.mxu0 0.0
        %1889 = vmatpush.msra.mxu0 0.0
        %1890 = vmatpush.msra.mxu0 0.0
        %1891 = vmatpush.msra.mxu0 0.0
        %1892 = vmatpush.msra.mxu0 0.0
        %1893 = vmatpush.msra.mxu0 0.0
        %1894 = vmatpush.msra.mxu0 0.0
        %1895 = vmatpush.msra.mxu0 0.0
        %1896 = vmatpush.msra.mxu0 0.0
        %1897 = vmatpush.msra.mxu0 %v1881
        %1898 = vmatpush.msra.mxu0 %v1862
        %1899 = vmatmul.f32.gmra.mxu0 %v1867
        %v1900 = vpop.f32.mrf.mxu0
        %v1901 = vadd.f32 0.0, %v1900
        %1902 = vmatmul.f32.gmra.mxu0 %v1870
        %v1903 = vpop.f32.mrf.mxu0
        %v1904 = vadd.f32 0.0, %v1903
        %1905 = vmatmul.f32.gmra.mxu0 %v1873
        %v1906 = vpop.f32.mrf.mxu0
        %v1907 = vadd.f32 0.0, %v1906
        %1908 = vmatmul.f32.gmra.mxu0 %v1876
        %v1909 = vpop.f32.mrf.mxu0
        %v1910 = vadd.f32 0.0, %v1909
        %1911 = vmatmul.f32.gmra.mxu0 %v1879
        %v1912 = vpop.f32.mrf.mxu0
        %v1913 = vadd.f32 0.0, %v1912
        %1914 = vdwg.mxu0
        %1920 = vrot.lane.b32.xlu0 %v1433, 8
        %v1921 = vpop.permute.xlu0 %1920
        %1922 = vrot.lane.b32.xlu0 %v1436, 8
        %v1923 = vpop.permute.xlu0 %1922
        %1924 = vrot.lane.b32.xlu0 %v1439, 8
        %v1925 = vpop.permute.xlu0 %1924
        %1926 = vrot.lane.b32.xlu0 %v1442, 8
        %v1927 = vpop.permute.xlu0 %1926
        %1928 = vrot.lane.b32.xlu0 %v1445, 8
        %v1929 = vpop.permute.xlu0 %1928
        %1940 = vrot.lane.b32.xlu0 %v1667, 16
        %v1941 = vpop.permute.xlu0 %1940
        %1942 = vrot.lane.b32.xlu0 %v1670, 16
        %v1943 = vpop.permute.xlu0 %1942
        %1944 = vrot.lane.b32.xlu0 %v1673, 16
        %v1945 = vpop.permute.xlu0 %1944
        %1946 = vrot.lane.b32.xlu0 %v1676, 16
        %v1947 = vpop.permute.xlu0 %1946
        %1948 = vrot.lane.b32.xlu0 %v1679, 16
        %v1949 = vpop.permute.xlu0 %1948
        %1960 = vrot.lane.b32.xlu0 %v1901, 24
        %v1961 = vpop.permute.xlu0 %1960
        %1962 = vrot.lane.b32.xlu0 %v1904, 24
        %v1963 = vpop.permute.xlu0 %1962
        %1964 = vrot.lane.b32.xlu0 %v1907, 24
        %v1965 = vpop.permute.xlu0 %1964
        %1966 = vrot.lane.b32.xlu0 %v1910, 24
        %v1967 = vpop.permute.xlu0 %1966
        %1968 = vrot.lane.b32.xlu0 %v1913, 24
        %v1969 = vpop.permute.xlu0 %1968
        %v1975 = vsel %vm990, %v1199, %v1921
        %v1976 = vsel %vm990, %v1202, %v1923
        %v1977 = vsel %vm990, %v1205, %v1925
        %v1978 = vsel %vm990, %v1208, %v1927
        %v1979 = vsel %vm990, %v1211, %v1929
        %vm1980 = vcmask 130048
        %v1981 = vsel %vm1980, %v1975, %v1941
        %v1982 = vsel %vm1980, %v1976, %v1943
        %v1983 = vsel %vm1980, %v1977, %v1945
        %v1984 = vsel %vm1980, %v1978, %v1947
        %v1985 = vsel %vm1980, %v1979, %v1949
        %vm1986 = vcmask 195584
        %v1987 = vsel %vm1986, %v1981, %v1961
        %v1988 = vsel %vm1986, %v1982, %v1963
        %v1989 = vsel %vm1986, %v1983, %v1965
        %v1990 = vsel %vm1986, %v1984, %v1967
        %v1991 = vsel %vm1986, %v1985, %v1969
        %v1992 = vld [vmem:[#allocation3] sm:$0xff]
        %v1993 = vld [vmem:[#allocation3 + $0x8] sm:$0xff]
        %v1994 = vld [vmem:[#allocation3 + $0x10] sm:$0xff]
        %v1995 = vld [vmem:[#allocation3 + $0x18] sm:$0xff]
        %v1996 = vld [vmem:[%s7] sm:$0x1]
        %v1998 = vperm.slane %v1996, 0
        %v2001 = vsel %vm332, %v1987, 0
        %v2004 = vsel %vm332, %v1988, 0
        %v2007 = vsel %vm332, %v1989, 0
        %v2010 = vsel %vm332, %v1990, 0
        %v2013 = vsel %vm332, %v1991, 0
        %2015 = vmatpush.msra.mxu0 0.0
        %2016 = vmatpush.msra.mxu0 0.0
        %2017 = vmatpush.msra.mxu0 0.0
        %2018 = vmatpush.msra.mxu0 0.0
        %2019 = vmatpush.msra.mxu0 0.0
        %2020 = vmatpush.msra.mxu0 0.0
        %2021 = vmatpush.msra.mxu0 0.0
        %2022 = vmatpush.msra.mxu0 0.0
        %2023 = vmatpush.msra.mxu0 0.0
        %2024 = vmatpush.msra.mxu0 0.0
        %2025 = vmatpush.msra.mxu0 0.0
        %2026 = vmatpush.msra.mxu0 0.0
        %2027 = vmatpush.msra.mxu0 %v1995
        %2028 = vmatpush.msra.mxu0 %v1994
        %2029 = vmatpush.msra.mxu0 %v1993
        %2030 = vmatpush.msra.mxu0 %v1992
        %2031 = vmatmul.f32.gmra.mxu0 %v2001
        %v2032 = vpop.f32.mrf.mxu0
        %v2033 = vadd.f32 %v1998, %v2032
        %2034 = vmatmul.f32.gmra.mxu0 %v2004
        %v2035 = vpop.f32.mrf.mxu0
        %v2036 = vadd.f32 %v1998, %v2035
        %2037 = vmatmul.f32.gmra.mxu0 %v2007
        %v2038 = vpop.f32.mrf.mxu0
        %v2039 = vadd.f32 %v1998, %v2038
        %2040 = vmatmul.f32.gmra.mxu0 %v2010
        %v2041 = vpop.f32.mrf.mxu0
        %v2042 = vadd.f32 %v1998, %v2041
        %2043 = vmatmul.f32.gmra.mxu0 %v2013
        %v2044 = vpop.f32.mrf.mxu0
        %v2045 = vadd.f32 %v1998, %v2044
        %2046 = vdwg.mxu0
        %2047 = vst.msk [vmem:[%s322] sm:$0xff] %vm332, %v2033
        %2048 = vst.msk [vmem:[%s322 + $0x8] sm:$0xff] %vm332, %v2036
        %2049 = vst.msk [vmem:[%s322 + $0x10] sm:$0xff] %vm332, %v2039
        %2050 = vst.msk [vmem:[%s322 + $0x18] sm:$0xff] %vm332, %v2042
        %vm2051 = vcmask 253952
        %2052 = vst.msk [vmem:[%s322 + $0x20] sm:$0x1] %vm2051, %v2045
        %p2053 = scmp.lt.s32.totalorder %s20, 1
        %s2054 = scalar_select %p2053, %s20, 1
        %s2055 = smul.addr %s2054, 5
        %s2056 = smul.addr %s2055, 8
        %s2057 = scalar_lea.vmem %s8, %s2056
        // Predicated region
        $region57: #{tpu_custom_call.1} parent=51 // pred_check
          %p2058 = pneg %p211
        $region58: #{tpu_custom_call.1} parent=51 // pred_check_branch
          %2060 = sbr.rel (%p2058) target = $region60
        $region59: #{tpu_custom_call.1} parent=51 // pred_region
          _
        $region60: #{tpu_custom_call.1} parent=51 // pred_fallthru
          _
      $region52: #{tpu_custom_call.1} parent=5 // pred_fallthru
        _
      %p2061 = scmp.le.s32.totalorder 2, %s15
      // Predicated region
      $region61: #{tpu_custom_call.1} parent=5 // pred_check
        %p2062 = pneg %p2061
      $region62: #{tpu_custom_call.1} parent=5 // pred_check_branch
        %2064 = sbr.rel (%p2062) target = $region64
      $region63: #{tpu_custom_call.1} parent=5 // pred_region
        %s2065 = ssub.s32 %s15, 2
        // Predicated region
        $region65: #{tpu_custom_call.1} parent=63 // pred_check
          %p2066 = pneg %p217
        $region66: #{tpu_custom_call.1} parent=63 // pred_check_branch
          %2068 = sbr.rel (%p2066) target = $region68
        $region67: #{tpu_custom_call.1} parent=63 // pred_region
          %p2069 = scmp.lt.s32.totalorder %s21, 1
          %s2070 = scalar_select %p2069, %s21, 1
          %s2071 = smul.addr %s2070, 5
          %s2072 = smul.addr %s2071, 8
          %s2073 = scalar_lea.vmem %s8, %s2072
        $region68: #{tpu_custom_call.1} parent=63 // pred_fallthru
          _
      $region64: #{tpu_custom_call.1} parent=5 // pred_fallthru
        _
    $region6: #{tpu_custom_call.1} parent=1 // loop_footer
      %s19 = sadd.s32 1, %s15
    $region7: #{tpu_custom_call.1} parent=1 // loop_footer_branch
      %14 = sbr.rel target = $region3
    $region8: #{tpu_custom_call.1} parent=1 // loop_exit
      _
    %2074 = vsyncpa [#allocation4], 1
    %s2075 = scalar_lea.sflag [#allocation4], 1
    %2076 = vsyncpa %s2075, 1

</llo_original>
